<compile_context>
chip_gen: v7x
topology: tpu7x:2x2x1
jax: 0.10.0
libtpu: 0.0.40
codegen_flags: <defaults>
</compile_context>

<pallas_src>
import math

import jax
import jax.numpy as jnp
from jax.experimental import pallas as pl
from jax.experimental.pallas import tpu as pltpu

D_K = D_V = 64
D_MODEL = 512
N_HEADS = 8
LN_EPS = 1e-5  # torch.nn.LayerNorm default


def _row_tile(n, target=256):
    """Largest tile <= target that divides n and is a multiple of 8 (or == n),
    preferring at least 2 tiles so both v7x TensorCores get work."""
    cap = min(target, max(n // 2, 8)) if n > 8 else n
    for t in range(min(cap, n), 0, -1):
        if n % t == 0 and (t % 8 == 0 or t == n):
            return t
    return n


# ----------------------------------------------------------------------------
# Kernel 1a: fused Q/K/V projection (self-attention fast path)
#   x: [TM, 512] @ w_qkv: [512, 1536] -> three lane-dense [TM, 512] outputs
# ----------------------------------------------------------------------------
def _qkv_proj_kernel(x_ref, w_ref, q_ref, k_ref, v_ref):
    y = jnp.dot(x_ref[...], w_ref[...], preferred_element_type=jnp.float32)
    q_ref[...] = y[:, :D_MODEL].astype(q_ref.dtype)
    k_ref[...] = y[:, D_MODEL:2 * D_MODEL].astype(k_ref.dtype)
    v_ref[...] = y[:, 2 * D_MODEL:].astype(v_ref.dtype)


def pallas_qkv_proj(x2d, w_qkv):
    """x2d: [M, 512], w_qkv: [512, 1536] -> (q, k, v), each [M, 512]."""
    M, K = x2d.shape
    N3 = w_qkv.shape[1]
    TM = _row_tile(M)
    out_sd = jax.ShapeDtypeStruct((M, D_MODEL), x2d.dtype)
    return pl.pallas_call(
        _qkv_proj_kernel,
        out_shape=(out_sd, out_sd, out_sd),
        grid=(M // TM,),
        in_specs=[
            pl.BlockSpec((TM, K), lambda i: (i, 0)),
            pl.BlockSpec((K, N3), lambda i: (0, 0)),   # weight stays resident
        ],
        out_specs=(
            pl.BlockSpec((TM, D_MODEL), lambda i: (i, 0)),
            pl.BlockSpec((TM, D_MODEL), lambda i: (i, 0)),
            pl.BlockSpec((TM, D_MODEL), lambda i: (i, 0)),
        ),
        compiler_params=pltpu.CompilerParams(dimension_semantics=("parallel",)),
    )(x2d, w_qkv)


# ----------------------------------------------------------------------------
# Kernel 1b: plain tiled linear (general path: distinct Q / K / V inputs)
# ----------------------------------------------------------------------------
def _linear_kernel(x_ref, w_ref, o_ref):
    o_ref[...] = jnp.dot(
        x_ref[...], w_ref[...], preferred_element_type=jnp.float32
    ).astype(o_ref.dtype)


def pallas_linear(x2d, w):
    """x2d: [M, K], w: [K, N] (already [in, out] layout) -> [M, N]."""
    M, K = x2d.shape
    N = w.shape[1]
    TM = _row_tile(M)
    return pl.pallas_call(
        _linear_kernel,
        out_shape=jax.ShapeDtypeStruct((M, N), x2d.dtype),
        grid=(M // TM,),
        in_specs=[
            pl.BlockSpec((TM, K), lambda i: (i, 0)),
            pl.BlockSpec((K, N), lambda i: (0, 0)),
        ],
        out_specs=pl.BlockSpec((TM, N), lambda i: (i, 0)),
        compiler_params=pltpu.CompilerParams(dimension_semantics=("parallel",)),
    )(x2d, w)


# ----------------------------------------------------------------------------
# Kernel 2: scaled dot-product attention.
#   One grid step = one (batch, q-tile); ALL 8 heads processed per step.
#   Consumes q/k/v in [B, L, H*64] layout, writes context lane-dense [B, L, 512].
# ----------------------------------------------------------------------------
def _attn_kernel(q_ref, k_ref, v_ref, ctx_ref, attn_ref):
    # q_ref: (TQ, H*Dk)   k_ref/v_ref: (Lk, H*D)   ctx_ref: (TQ, H*Dv)
    # attn_ref: (H, TQ, Lk)
    scale = 1.0 / math.sqrt(D_K)
    k_all = k_ref[...]
    v_all = v_ref[...]
    q_all = q_ref[...] * scale          # scale q (TQ x 64/head), not the scores
    for h in range(N_HEADS):            # static unroll over heads
        qh = q_all[:, h * D_K:(h + 1) * D_K]          # (TQ, Dk)
        kh = k_all[:, h * D_K:(h + 1) * D_K]          # (Lk, Dk)
        vh = v_all[:, h * D_V:(h + 1) * D_V]          # (Lk, Dv)
        # QK^T as a transposed-RHS contraction (MXU-native, no explicit .T)
        s = jax.lax.dot_general(
            qh, kh, (((1,), (1,)), ((), ())),
            preferred_element_type=jnp.float32)       # (TQ, Lk)
        # attn_mask intentionally NOT applied (reference masked_fill result
        # is discarded -- see module-level note).
        m = jnp.max(s, axis=-1, keepdims=True)
        e = jnp.exp(s - m)
        p = e * pl.reciprocal(jnp.sum(e, axis=-1, keepdims=True), approx=True)
        attn_ref[h] = p.astype(attn_ref.dtype)
        ctx_ref[:, h * D_V:(h + 1) * D_V] = jnp.dot(
            p.astype(vh.dtype), vh, preferred_element_type=jnp.float32
        ).astype(ctx_ref.dtype)
    # TODO(synk): for long sequences (Lk >~ 512) add flash-style online-softmax
    # tiling over Lk with a VMEM accumulator instead of full (TQ, Lk) scores.


def pallas_attention(q, k, v):
    """q: [B, Lq, H*Dk], k: [B, Lk, H*Dk], v: [B, Lk, H*Dv]
    -> (context [B, Lq, H*Dv], attn [B, H, Lq, Lk])."""
    B, Lq, _ = q.shape
    Lk = k.shape[1]
    TQ = _row_tile(Lq, target=256)
    sq = pl.Squeezed()
    return pl.pallas_call(
        _attn_kernel,
        out_shape=(
            jax.ShapeDtypeStruct((B, Lq, N_HEADS * D_V), q.dtype),
            jax.ShapeDtypeStruct((B, N_HEADS, Lq, Lk), jnp.float32),
        ),
        grid=(B, Lq // TQ),
        in_specs=[
            pl.BlockSpec((sq, TQ, N_HEADS * D_K), lambda b, i: (b, i, 0)),
            pl.BlockSpec((sq, Lk, N_HEADS * D_K), lambda b, i: (b, 0, 0)),
            pl.BlockSpec((sq, Lk, N_HEADS * D_V), lambda b, i: (b, 0, 0)),
        ],
        out_specs=(
            pl.BlockSpec((sq, TQ, N_HEADS * D_V), lambda b, i: (b, i, 0)),
            pl.BlockSpec((sq, N_HEADS, TQ, Lk), lambda b, i: (b, 0, i, 0)),
        ),
        compiler_params=pltpu.CompilerParams(
            dimension_semantics=("parallel", "parallel")),
    )(q, k, v)


# ----------------------------------------------------------------------------
# Kernel 3: output projection + residual add + LayerNorm (gamma=1, beta=0)
# ----------------------------------------------------------------------------
def _out_ln_kernel(ctx_ref, w_ref, res_ref, o_ref):
    y = jnp.dot(ctx_ref[...], w_ref[...], preferred_element_type=jnp.float32)
    y = y + res_ref[...].astype(jnp.float32)
    mean = jnp.mean(y, axis=-1, keepdims=True)
    var = jnp.mean(jnp.square(y - mean), axis=-1, keepdims=True)
    o_ref[...] = ((y - mean) * jax.lax.rsqrt(var + LN_EPS)).astype(o_ref.dtype)


def pallas_out_proj_layernorm(ctx2d, w_fc, res2d):
    """ctx2d: [M, H*Dv], w_fc: [H*Dv, D_MODEL], res2d: [M, D_MODEL]."""
    M, Kd = ctx2d.shape
    N = w_fc.shape[1]
    TM = _row_tile(M)
    return pl.pallas_call(
        _out_ln_kernel,
        out_shape=jax.ShapeDtypeStruct((M, N), ctx2d.dtype),
        grid=(M // TM,),
        in_specs=[
            pl.BlockSpec((TM, Kd), lambda i: (i, 0)),
            pl.BlockSpec((Kd, N), lambda i: (0, 0)),
            pl.BlockSpec((TM, N), lambda i: (i, 0)),
        ],
        out_specs=pl.BlockSpec((TM, N), lambda i: (i, 0)),
        compiler_params=pltpu.CompilerParams(dimension_semantics=("parallel",)),
    )(ctx2d, w_fc, res2d)


# ----------------------------------------------------------------------------
# MultiHeadAttention forward (wrapper reshapes are row-major-compatible, i.e.
# free; all transposes/relayouts happen inside the kernels in VMEM).
# ----------------------------------------------------------------------------
def multi_head_attention(params, input_Q, input_K, input_V, attn_mask):
    B, Lq, _ = input_Q.shape
    Lk = input_K.shape[1]
    w_qkv = params["w_qkv"]  # [D_MODEL, 3*D_MODEL]

    if (input_K is input_Q) and (input_V is input_Q):
        # Self-attention: one fused projection, activation read from HBM once.
        q2d, k2d, v2d = pallas_qkv_proj(input_Q.reshape(B * Lq, D_MODEL), w_qkv)
    else:
        q2d = pallas_linear(input_Q.reshape(B * Lq, D_MODEL), w_qkv[:, :D_MODEL])
        k2d = pallas_linear(input_K.reshape(B * Lk, D_MODEL),
                            w_qkv[:, D_MODEL:2 * D_MODEL])
        v2d = pallas_linear(input_V.reshape(B * Lk, D_MODEL),
                            w_qkv[:, 2 * D_MODEL:])

    q = q2d.reshape(B, Lq, N_HEADS * D_K)
    k = k2d.reshape(B, Lk, N_HEADS * D_K)
    v = v2d.reshape(B, Lk, N_HEADS * D_V)

    context, attn = pallas_attention(q, k, v)   # attn_mask intentionally unused

    out = pallas_out_proj_layernorm(
        context.reshape(B * Lq, N_HEADS * D_V),
        params["w_fc"],
        input_Q.reshape(B * Lq, D_MODEL),
    )
    # TODO(synk): optional bf16 compute path (bf16 operands, f32 accumulation /
    # softmax / LayerNorm stats) for higher MXU throughput on v6e/v7x.
    return out.reshape(B, Lq, D_MODEL), attn


def init_params(key):
    kq, kk, kv, kf = jax.random.split(key, 4)
    b_in = 1.0 / math.sqrt(D_MODEL)        # nn.Linear default init bound
    b_fc = 1.0 / math.sqrt(N_HEADS * D_V)
    # PyTorch Linear weight shape: (out_features, in_features)
    W_Q = jax.random.uniform(kq, (D_K * N_HEADS, D_MODEL), jnp.float32, -b_in, b_in)
    W_K = jax.random.uniform(kk, (D_K * N_HEADS, D_MODEL), jnp.float32, -b_in, b_in)
    W_V = jax.random.uniform(kv, (D_V * N_HEADS, D_MODEL), jnp.float32, -b_in, b_in)
    fc = jax.random.uniform(kf, (D_MODEL, N_HEADS * D_V), jnp.float32, -b_fc, b_fc)
    # One-time layout prep: kernels want [in, out] weights; fuse Q/K/V.
    return {
        "w_qkv": jnp.concatenate([W_Q.T, W_K.T, W_V.T], axis=1),  # [512, 1536]
        "w_fc": fc.T,                                             # [512, 512]
    }


if __name__ == "__main__":
    key = jax.random.PRNGKey(0)
    kp, kx = jax.random.split(key)
    params = init_params(kp)

    B, L = 2, 8
    x = jax.random.normal(kx, (B, L, D_MODEL), jnp.float32)
    # self-attention style call: Q = K = V = x
    attn_mask = jnp.zeros((B, L, L), dtype=jnp.bool_)

    out, attn = multi_head_attention(params, x, x, x, attn_mask)
    jax.block_until_ready((out, attn))

    assert out.shape == (B, L, D_MODEL)
    assert attn.shape == (B, N_HEADS, L, L)
    print("KERNEL_OK")
</pallas_src>

<mosaic_0001>
module attributes {stable_mosaic.version = 11 : i64} {
  func.func @_qkv_proj_kernel(%arg0: i32, %arg1: memref<8x512xf32, #tpu.memory_space<vmem>>, %arg2: memref<512x1536xf32, #tpu.memory_space<vmem>>, %arg3: memref<8x512xf32, #tpu.memory_space<vmem>>, %arg4: memref<8x512xf32, #tpu.memory_space<vmem>>, %arg5: memref<8x512xf32, #tpu.memory_space<vmem>>) attributes {dimension_semantics = [#tpu.dimension_semantics<parallel>], iteration_bounds = array<i64: 2>, scalar_prefetch = 0 : i64, scratch_operands = 0 : i64, tpu.core_type = #tpu.core_type<tc>, window_params = [{transform_indices = @transform_0, window_bounds = array<i64: 8, 512>}, {pipeline_mode = #tpu.pipeline_mode<synchronous>, transform_indices = @transform_1, window_bounds = array<i64: 512, 1536>}, {transform_indices = @transform_2, window_bounds = array<i64: 8, 512>}, {transform_indices = @transform_3, window_bounds = array<i64: 8, 512>}, {transform_indices = @transform_4, window_bounds = array<i64: 8, 512>}]} {
    %c0 = arith.constant 0 : index
    %c0_0 = arith.constant 0 : index
    %0 = vector.load %arg1[%c0, %c0_0] : memref<8x512xf32, #tpu.memory_space<vmem>>, vector<8x512xf32>
    %c0_1 = arith.constant 0 : index
    %c0_2 = arith.constant 0 : index
    %1 = vector.load %arg2[%c0_1, %c0_2] : memref<512x1536xf32, #tpu.memory_space<vmem>>, vector<512x1536xf32>
    %cst = arith.constant dense<0.000000e+00> : vector<8x1536xf32>
    %2 = tpu.matmul %0, %1, %cst {dimension_numbers = #tpu.dot_dimension_numbers<[1], [0], [0], [1], [0, 0, 1, 1], [], []>} : vector<8x512xf32>, vector<512x1536xf32>, vector<8x1536xf32> -> vector<8x1536xf32>
    %3 = vector.extract_strided_slice %2 {offsets = [0, 0], sizes = [8, 512], strides = [1, 1]} : vector<8x1536xf32> to vector<8x512xf32>
    %c0_3 = arith.constant 0 : index
    %c0_4 = arith.constant 0 : index
    %4 = vector.load %arg3[%c0_3, %c0_4] : memref<8x512xf32, #tpu.memory_space<vmem>>, vector<8x512xf32>
    tpu.vector_store %arg3[%c0_3, %c0_4], %3 {strides = array<i32>} : memref<8x512xf32, #tpu.memory_space<vmem>>, vector<8x512xf32>,
    %5 = vector.extract_strided_slice %2 {offsets = [0, 512], sizes = [8, 512], strides = [1, 1]} : vector<8x1536xf32> to vector<8x512xf32>
    %c0_5 = arith.constant 0 : index
    %c0_6 = arith.constant 0 : index
    %6 = vector.load %arg4[%c0_5, %c0_6] : memref<8x512xf32, #tpu.memory_space<vmem>>, vector<8x512xf32>
    tpu.vector_store %arg4[%c0_5, %c0_6], %5 {strides = array<i32>} : memref<8x512xf32, #tpu.memory_space<vmem>>, vector<8x512xf32>,
    %7 = vector.extract_strided_slice %2 {offsets = [0, 1024], sizes = [8, 512], strides = [1, 1]} : vector<8x1536xf32> to vector<8x512xf32>
    %c0_7 = arith.constant 0 : index
    %c0_8 = arith.constant 0 : index
    %8 = vector.load %arg5[%c0_7, %c0_8] : memref<8x512xf32, #tpu.memory_space<vmem>>, vector<8x512xf32>
    tpu.vector_store %arg5[%c0_7, %c0_8], %7 {strides = array<i32>} : memref<8x512xf32, #tpu.memory_space<vmem>>, vector<8x512xf32>,
    return
  }
  func.func @transform_0(%arg0: i32) -> (i32, i32) {
    %c0_i32 = arith.constant 0 : i32
    %c0_i32_0 = arith.constant 0 : i32
    return %arg0, %c0_i32 : i32, i32
  }
  func.func @transform_1(%arg0: i32) -> (i32, i32) {
    %c0_i32 = arith.constant 0 : i32
    %c0_i32_0 = arith.constant 0 : i32
    %c0_i32_1 = arith.constant 0 : i32
    return %c0_i32, %c0_i32_0 : i32, i32
  }
  func.func @transform_2(%arg0: i32) -> (i32, i32) {
    %c0_i32 = arith.constant 0 : i32
    %c0_i32_0 = arith.constant 0 : i32
    return %arg0, %c0_i32 : i32, i32
  }
  func.func @transform_3(%arg0: i32) -> (i32, i32) {
    %c0_i32 = arith.constant 0 : i32
    %c0_i32_0 = arith.constant 0 : i32
    return %arg0, %c0_i32 : i32, i32
  }
  func.func @transform_4(%arg0: i32) -> (i32, i32) {
    %c0_i32 = arith.constant 0 : i32
    %c0_i32_0 = arith.constant 0 : i32
    return %arg0, %c0_i32 : i32, i32
  }
}

</mosaic_0001>

<llo_original>
// kernel: tpu_custom_call.1
$region0: #{tpu_custom_call.1}
  #allocation0 [shape = 'u32[]', space=smem, size = 0x4, offset = 0x4, fixed_abs, tag = 'smem constant byte address 0x4 - core index']
  #allocation1 [shape = 'u32[144,128]{1,0:T(1,128)}', space=vmem, size = 0x12000, scoped, tag = 'internal scratch']
  %s0 = inlined_call_operand.hbm [shape: f32[16,512], index: 0, kind: input, shape index: {}]
  %s1 = inlined_call_operand.hbm [shape: f32[512,1536], index: 1, kind: input, shape index: {}]
  %s2 = inlined_call_operand.hbm [shape: f32[16,512], index: 2, kind: output, shape index: {0}]
  %s3 = inlined_call_operand.hbm [shape: f32[16,512], index: 3, kind: output, shape index: {1}]
  %s4 = inlined_call_operand.hbm [shape: f32[16,512], index: 4, kind: output, shape index: {2}]
  %5 = xla_tuple %s2, %s3, %s4
  %s6 = sld [smem:[#allocation0]]
  $region65: #{tpu_custom_call.1} parent=0
    _
  %s8 = ssub.s32 1, %s6
  %s9 = scalar_select 0, %s8, %s6
  $region1: #{tpu_custom_call.1} parent=0
    #allocation2 [shape = 'u8[32768]{0}', space=vmem, size = 0x8000, scoped, tag = 'input window, operand 0']
    #allocation3 [shape = 's32[2]{0}', space=sflag, size = 0x8, scoped, tag = 'scoped memory for tpu_custom_call.1']
    #allocation4 [shape = 's32[2]{0}', space=sflag, size = 0x8, scoped, tag = 'scoped memory for tpu_custom_call.1']
    #allocation5 [shape = 'u8[3145728]{0}', space=vmem, size = 0x300000, scoped, tag = 'input window, operand 1, single buffered']
    #allocation6 [shape = 's32[1]{0}', space=sflag, size = 0x4, scoped, tag = 'scoped memory for tpu_custom_call.1']
    #allocation7 [shape = 'u8[32768]{0}', space=vmem, size = 0x8000, scoped, tag = 'output window, operand 0']
    #allocation8 [shape = 'u8[32768]{0}', space=vmem, size = 0x8000, scoped, tag = 'output window, operand 1']
    #allocation9 [shape = 's32[2]{0}', space=sflag, size = 0x8, scoped, tag = 'scoped memory for tpu_custom_call.1']
    #allocation10 [shape = 'u8[32768]{0}', space=vmem, size = 0x8000, scoped, tag = 'output window, operand 2']
    %10 = vsyncpa [#allocation3], 0
    %s11 = scalar_lea.sflag [#allocation3], 1
    %12 = vsyncpa %s11, 0
    %13 = vsyncpa [#allocation6], 0
    %14 = vsyncpa [#allocation4], 0
    %s15 = scalar_lea.sflag [#allocation4], 1
    %16 = vsyncpa %s15, 0
    %17 = vsyncpa [#allocation9], 0
    %s18 = scalar_lea.sflag [#allocation9], 1
    %19 = vsyncpa %s18, 0
    loop: start=0, step=1, limit=4
    $region2: #{tpu_custom_call.1} parent=1 // loop_pre_header
      _
    $region3: #{tpu_custom_call.1} parent=1 // loop_header
      %s21 = sphi 0, %s25
      %p22 = scmp.ge.s32.totalorder %s21, 4
      %s31 = sphi 0, %s33
      %s34 = sphi 0, %s31
      %s35 = sphi 0, %s34
      %s51 = sphi 0, %s35
      %s55 = sphi 0, %s55
      %s57 = sphi 0, %s55
      %s58 = sphi 0, %s57
      %s72 = sphi 0, %s58
      %s78 = sphi 0, %s80
      %s81 = sphi 0, %s78
      %s82 = sphi 0, %s81
      %s98 = sphi 0, %s82
      %s104 = sphi 0, %s106
      %s107 = sphi 0, %s104
      %s108 = sphi 0, %s107
      %s124 = sphi 0, %s108
      %s130 = sphi 0, %s132
      %s133 = sphi 0, %s130
      %s134 = sphi 0, %s133
      %s150 = sphi 0, %s134
    $region4: #{tpu_custom_call.1} parent=1 // loop_header_branch
      %24 = sbr.rel (%p22) target = $region8
    $region5: #{tpu_custom_call.1} parent=1 // loop_body
      %s26 = ssub.s32 %s21, 1
      %s27 = ssub.s32 %s21, 2
      %s28 = sadd.s32 %s21, 1
      %s29 = ssub.s32 %s21, %s28
      %p30 = scmp.eq.s32.totalorder %s29, 0
      %s32 = sadd.s32 %s31, 1
      %s33 = scalar_select %p30, %s31, %s32
      %p36 = pneg %p30
      %p37 = scmp.eq.s32.totalorder %s21, 1
      %p38 = por %p36, %p37
      %p39 = scmp.ne.s32.totalorder %s31, %s34
      %p40 = scmp.eq.s32.totalorder %s21, 0
      %p41 = por %p39, %p40
      %p42 = scmp.ne.s32.totalorder %s31, %s34
      %p43 = scmp.eq.s32.totalorder %s26, 1
      %p44 = por %p42, %p43
      %p45 = scmp.ne.s32.totalorder %s34, %s35
      %p46 = scmp.eq.s32.totalorder %s26, 0
      %p47 = por %p45, %p46
      %p48 = scmp.ne.s32.totalorder %s34, %s35
      %p49 = scmp.eq.s32.totalorder %s27, 1
      %p50 = por %p48, %p49
      %p52 = scmp.ne.s32.totalorder %s35, %s51
      %p53 = scmp.eq.s32.totalorder %s27, 0
      %p54 = por %p52, %p53
      %s56 = sadd.s32 %s55, 1
      %p59 = scmp.eq.s32.totalorder %s21, 1
      %p60 = scmp.ne.s32.totalorder %s55, %s57
      %p61 = scmp.eq.s32.totalorder %s21, 0
      %p62 = por %p60, %p61
      %p63 = scmp.ne.s32.totalorder %s55, %s57
      %p64 = scmp.eq.s32.totalorder %s26, 1
      %p65 = por %p63, %p64
      %p66 = scmp.ne.s32.totalorder %s57, %s58
      %p67 = scmp.eq.s32.totalorder %s26, 0
      %p68 = por %p66, %p67
      %p69 = scmp.ne.s32.totalorder %s57, %s58
      %p70 = scmp.eq.s32.totalorder %s27, 1
      %p71 = por %p69, %p70
      %p73 = scmp.ne.s32.totalorder %s58, %s72
      %p74 = scmp.eq.s32.totalorder %s27, 0
      %p75 = por %p73, %p74
      %s76 = ssub.s32 %s21, %s28
      %p77 = scmp.eq.s32.totalorder %s76, 0
      %s79 = sadd.s32 %s78, 1
      %s80 = scalar_select %p77, %s78, %s79
      %p83 = pneg %p77
      %p84 = scmp.eq.s32.totalorder %s21, 1
      %p85 = por %p83, %p84
      %p86 = scmp.ne.s32.totalorder %s78, %s81
      %p87 = scmp.eq.s32.totalorder %s21, 0
      %p88 = por %p86, %p87
      %p89 = scmp.ne.s32.totalorder %s78, %s81
      %p90 = scmp.eq.s32.totalorder %s26, 1
      %p91 = por %p89, %p90
      %p92 = scmp.ne.s32.totalorder %s81, %s82
      %p93 = scmp.eq.s32.totalorder %s26, 0
      %p94 = por %p92, %p93
      %p95 = scmp.ne.s32.totalorder %s81, %s82
      %p96 = scmp.eq.s32.totalorder %s27, 1
      %p97 = por %p95, %p96
      %p99 = scmp.ne.s32.totalorder %s82, %s98
      %p100 = scmp.eq.s32.totalorder %s27, 0
      %p101 = por %p99, %p100
      %s102 = ssub.s32 %s21, %s28
      %p103 = scmp.eq.s32.totalorder %s102, 0
      %s105 = sadd.s32 %s104, 1
      %s106 = scalar_select %p103, %s104, %s105
      %p109 = pneg %p103
      %p110 = scmp.eq.s32.totalorder %s21, 1
      %p111 = por %p109, %p110
      %p112 = scmp.ne.s32.totalorder %s104, %s107
      %p113 = scmp.eq.s32.totalorder %s21, 0
      %p114 = por %p112, %p113
      %p115 = scmp.ne.s32.totalorder %s104, %s107
      %p116 = scmp.eq.s32.totalorder %s26, 1
      %p117 = por %p115, %p116
      %p118 = scmp.ne.s32.totalorder %s107, %s108
      %p119 = scmp.eq.s32.totalorder %s26, 0
      %p120 = por %p118, %p119
      %p121 = scmp.ne.s32.totalorder %s107, %s108
      %p122 = scmp.eq.s32.totalorder %s27, 1
      %p123 = por %p121, %p122
      %p125 = scmp.ne.s32.totalorder %s108, %s124
      %p126 = scmp.eq.s32.totalorder %s27, 0
      %p127 = por %p125, %p126
      %s128 = ssub.s32 %s21, %s28
      %p129 = scmp.eq.s32.totalorder %s128, 0
      %s131 = sadd.s32 %s130, 1
      %s132 = scalar_select %p129, %s130, %s131
      %p135 = pneg %p129
      %p136 = scmp.eq.s32.totalorder %s21, 1
      %p137 = por %p135, %p136
      %p138 = scmp.ne.s32.totalorder %s130, %s133
      %p139 = scmp.eq.s32.totalorder %s21, 0
      %p140 = por %p138, %p139
      %p141 = scmp.ne.s32.totalorder %s130, %s133
      %p142 = scmp.eq.s32.totalorder %s26, 1
      %p143 = por %p141, %p142
      %p144 = scmp.ne.s32.totalorder %s133, %s134
      %p145 = scmp.eq.s32.totalorder %s26, 0
      %p146 = por %p144, %p145
      %p147 = scmp.ne.s32.totalorder %s133, %s134
      %p148 = scmp.eq.s32.totalorder %s27, 1
      %p149 = por %p147, %p148
      %p151 = scmp.ne.s32.totalorder %s134, %s150
      %p152 = scmp.eq.s32.totalorder %s27, 0
      %p153 = por %p151, %p152
      %p154 = scmp.le.s32.totalorder 1, %s21
      %p155 = scmp.lt.s32.totalorder %s21, 3
      %p156 = pnand %p154, %p155
      %p157 = pneg %p156
      // Predicated region
      $region9: #{tpu_custom_call.1} parent=5 // pred_check
        _
      $region10: #{tpu_custom_call.1} parent=5 // pred_check_branch
        %159 = sbr.rel (%p156) target = $region12
      $region11: #{tpu_custom_call.1} parent=5 // pred_region
        %s160 = ssub.s32 %s21, 1
        // Predicated region
        $region13: #{tpu_custom_call.1} parent=11 // pred_check
          %p161 = pneg %p68
        $region14: #{tpu_custom_call.1} parent=11 // pred_check_branch
          %163 = sbr.rel (%p161) target = $region16
        $region15: #{tpu_custom_call.1} parent=11 // pred_region
          %s165 = ssub.s32 98304, 98304
          %166 = vsyncadd [#allocation6], %s165
          %s167 = sshll.u32 [#allocation5], 4
          %s168 = int_to_ptr.vmem [resolvable:$true] %s167
          %173 = dma.hbm_to_vmem [thread:$0]  %s1, 98304, %s168, [#allocation6], 1536, 1536, 96
        $region16: #{tpu_custom_call.1} parent=11 // pred_fallthru
          _
      $region12: #{tpu_custom_call.1} parent=5 // pred_fallthru
        _
      %p174 = scmp.lt.s32.totalorder %s21, 2
      // Predicated region
      $region17: #{tpu_custom_call.1} parent=5 // pred_check
        %p175 = pneg %p174
      $region18: #{tpu_custom_call.1} parent=5 // pred_check_branch
        %177 = sbr.rel (%p175) target = $region20
      $region19: #{tpu_custom_call.1} parent=5 // pred_region
        // Predicated region
        $region21: #{tpu_custom_call.1} parent=19 // pred_check
          %p178 = pneg %p41
        $region22: #{tpu_custom_call.1} parent=19 // pred_check_branch
          %180 = sbr.rel (%p178) target = $region24
        $region23: #{tpu_custom_call.1} parent=19 // pred_region
          %s181 = sand.u32 %s31, 1
          %s182 = scalar_lea.sflag [#allocation3], %s181
          %s183 = sand.u32 %s31, 1
          %s184 = smul.addr %s183, 32
          %s185 = scalar_lea.vmem [#allocation2], %s184
          %s187 = ssub.s32 512, 512
          %188 = vsyncadd %s182, %s187
          %s189 = smul.addr %s21, 4
          %s190 = smul.addr %s189, 128
          %s191 = scalar_lea.hbm %s0, %s190
          %s193 = sshll.u32 %s185, 4
          %s194 = int_to_ptr.vmem [resolvable:$true] %s193
          %196 = dma.hbm_to_vmem [thread:$0]  %s191, 512, %s194, %s182
        $region24: #{tpu_custom_call.1} parent=19 // pred_fallthru
          _
      $region20: #{tpu_custom_call.1} parent=5 // pred_fallthru
        _
      %p197 = scmp.le.s32.totalorder 1, %s21
      %p198 = scmp.lt.s32.totalorder %s21, 3
      %p199 = pnand %p197, %p198
      %p200 = pneg %p199
      // Predicated region
      $region25: #{tpu_custom_call.1} parent=5 // pred_check
        _
      $region26: #{tpu_custom_call.1} parent=5 // pred_check_branch
        %202 = sbr.rel (%p199) target = $region28
      $region27: #{tpu_custom_call.1} parent=5 // pred_region
        %s203 = ssub.s32 %s21, 1
        %s204 = sand.u32 %s34, 1
        %s205 = scalar_lea.sflag [#allocation3], %s204
        %s206 = sand.u32 %s34, 1
        %s207 = smul.addr %s206, 32
        %s208 = scalar_lea.vmem [#allocation2], %s207
        // Predicated region
        $region29: #{tpu_custom_call.1} parent=27 // pred_check
          %p209 = pneg %p47
        $region30: #{tpu_custom_call.1} parent=27 // pred_check_branch
          %211 = sbr.rel (%p209) target = $region32
        $region31: #{tpu_custom_call.1} parent=27 // pred_region
          %212 = dma.done %s205, 512
        $region32: #{tpu_custom_call.1} parent=27 // pred_fallthru
          _
        // Predicated region
        $region33: #{tpu_custom_call.1} parent=27 // pred_check
          %p213 = pneg %p68
        $region34: #{tpu_custom_call.1} parent=27 // pred_check_branch
          %215 = sbr.rel (%p213) target = $region36
        $region35: #{tpu_custom_call.1} parent=27 // pred_region
          %216 = dma.done [#allocation6], 98304
        $region36: #{tpu_custom_call.1} parent=27 // pred_fallthru
          _
        %s217 = sand.u32 %s34, 1
        %s218 = scalar_lea.sflag [#allocation3], %s217
        %s219 = sand.u32 %s34, 1
        %s220 = smul.addr %s219, 32
        %s221 = scalar_lea.vmem [#allocation2], %s220
        %p222 = pneg %p47
        %p223 = pneg %p44
        %p224 = pneg %p68
        %p225 = pneg %p65
        %p226 = pneg %p94
        %p227 = pneg %p91
        %s228 = sand.u32 %s81, 1
        %s229 = scalar_lea.sflag [#allocation4], %s228
        %s230 = sand.u32 %s81, 1
        %s231 = smul.addr %s230, 32
        %s232 = scalar_lea.vmem [#allocation7], %s231
        %p233 = pneg %p120
        %p234 = pneg %p117
        %s235 = sand.u32 %s26, 1
        %s236 = scalar_lea.sflag [#allocation9], %s235
        %s237 = sand.u32 %s107, 1
        %s238 = smul.addr %s237, 32
        %s239 = scalar_lea.vmem [#allocation8], %s238
        %p240 = pneg %p146
        %p241 = pneg %p143
        %s242 = sand.u32 %s26, 1
        %s243 = scalar_lea.sflag [#allocation9], %s242
        %s244 = sand.u32 %s133, 1
        %s245 = smul.addr %s244, 32
        %s246 = scalar_lea.vmem [#allocation10], %s245
        %v247 = vld [vmem:[%s208] sm:$0xff]
        %v248 = vld [vmem:[%s208 + $0x8] sm:$0xff]
        %v249 = vld [vmem:[%s208 + $0x10] sm:$0xff]
        %v250 = vld [vmem:[%s208 + $0x18] sm:$0xff]
        %v251 = vld [vmem:[#allocation5] sm:$0xff]
        %v252 = vld [vmem:[#allocation5 + $0x8] sm:$0xff]
        %v253 = vld [vmem:[#allocation5 + $0x10] sm:$0xff]
        %v254 = vld [vmem:[#allocation5 + $0x18] sm:$0xff]
        %v255 = vld [vmem:[#allocation5 + $0x20] sm:$0xff]
        %v256 = vld [vmem:[#allocation5 + $0x28] sm:$0xff]
        %v257 = vld [vmem:[#allocation5 + $0x30] sm:$0xff]
        %v258 = vld [vmem:[#allocation5 + $0x38] sm:$0xff]
        %v259 = vld [vmem:[#allocation5 + $0x40] sm:$0xff]
        %v260 = vld [vmem:[#allocation5 + $0x48] sm:$0xff]
        %v261 = vld [vmem:[#allocation5 + $0x50] sm:$0xff]
        %v262 = vld [vmem:[#allocation5 + $0x58] sm:$0xff]
        %v263 = vld [vmem:[#allocation5 + $0x60] sm:$0xff]
        %v264 = vld [vmem:[#allocation5 + $0x68] sm:$0xff]
        %v265 = vld [vmem:[#allocation5 + $0x70] sm:$0xff]
        %v266 = vld [vmem:[#allocation5 + $0x78] sm:$0xff]
        %v267 = vld [vmem:[#allocation5 + $0x80] sm:$0xff]
        %v268 = vld [vmem:[#allocation5 + $0x88] sm:$0xff]
        %v269 = vld [vmem:[#allocation5 + $0x90] sm:$0xff]
        %v270 = vld [vmem:[#allocation5 + $0x98] sm:$0xff]
        %v271 = vld [vmem:[#allocation5 + $0xa0] sm:$0xff]
        %v272 = vld [vmem:[#allocation5 + $0xa8] sm:$0xff]
        %v273 = vld [vmem:[#allocation5 + $0xb0] sm:$0xff]
        %v274 = vld [vmem:[#allocation5 + $0xb8] sm:$0xff]
        %v275 = vld [vmem:[#allocation5 + $0xc0] sm:$0xff]
        %v276 = vld [vmem:[#allocation5 + $0xc8] sm:$0xff]
        %v277 = vld [vmem:[#allocation5 + $0xd0] sm:$0xff]
        %v278 = vld [vmem:[#allocation5 + $0xd8] sm:$0xff]
        %v279 = vld [vmem:[#allocation5 + $0xe0] sm:$0xff]
        %v280 = vld [vmem:[#allocation5 + $0xe8] sm:$0xff]
        %v281 = vld [vmem:[#allocation5 + $0xf0] sm:$0xff]
        %v282 = vld [vmem:[#allocation5 + $0xf8] sm:$0xff]
        %v283 = vld [vmem:[#allocation5 + $0x100] sm:$0xff]
        %v284 = vld [vmem:[#allocation5 + $0x108] sm:$0xff]
        %v285 = vld [vmem:[#allocation5 + $0x110] sm:$0xff]
        %v286 = vld [vmem:[#allocation5 + $0x118] sm:$0xff]
        %v287 = vld [vmem:[#allocation5 + $0x120] sm:$0xff]
        %v288 = vld [vmem:[#allocation5 + $0x128] sm:$0xff]
        %v289 = vld [vmem:[#allocation5 + $0x130] sm:$0xff]
        %v290 = vld [vmem:[#allocation5 + $0x138] sm:$0xff]
        %v291 = vld [vmem:[#allocation5 + $0x140] sm:$0xff]
        %v292 = vld [vmem:[#allocation5 + $0x148] sm:$0xff]
        %v293 = vld [vmem:[#allocation5 + $0x150] sm:$0xff]
        %v294 = vld [vmem:[#allocation5 + $0x158] sm:$0xff]
        %v295 = vld [vmem:[#allocation5 + $0x160] sm:$0xff]
        %v296 = vld [vmem:[#allocation5 + $0x168] sm:$0xff]
        %v297 = vld [vmem:[#allocation5 + $0x170] sm:$0xff]
        %v298 = vld [vmem:[#allocation5 + $0x178] sm:$0xff]
        %v299 = vld [vmem:[#allocation5 + $0x180] sm:$0xff]
        %v300 = vld [vmem:[#allocation5 + $0x188] sm:$0xff]
        %v301 = vld [vmem:[#allocation5 + $0x190] sm:$0xff]
        %v302 = vld [vmem:[#allocation5 + $0x198] sm:$0xff]
        %v303 = vld [vmem:[#allocation5 + $0x1a0] sm:$0xff]
        %v304 = vld [vmem:[#allocation5 + $0x1a8] sm:$0xff]
        %v305 = vld [vmem:[#allocation5 + $0x1b0] sm:$0xff]
        %v306 = vld [vmem:[#allocation5 + $0x1b8] sm:$0xff]
        %v307 = vld [vmem:[#allocation5 + $0x1c0] sm:$0xff]
        %v308 = vld [vmem:[#allocation5 + $0x1c8] sm:$0xff]
        %v309 = vld [vmem:[#allocation5 + $0x1d0] sm:$0xff]
        %v310 = vld [vmem:[#allocation5 + $0x1d8] sm:$0xff]
        %v311 = vld [vmem:[#allocation5 + $0x1e0] sm:$0xff]
        %v312 = vld [vmem:[#allocation5 + $0x1e8] sm:$0xff]
        %v313 = vld [vmem:[#allocation5 + $0x1f0] sm:$0xff]
        %v314 = vld [vmem:[#allocation5 + $0x1f8] sm:$0xff]
        %v315 = vld [vmem:[#allocation5 + $0x200] sm:$0xff]
        %v316 = vld [vmem:[#allocation5 + $0x208] sm:$0xff]
        %v317 = vld [vmem:[#allocation5 + $0x210] sm:$0xff]
        %v318 = vld [vmem:[#allocation5 + $0x218] sm:$0xff]
        %v319 = vld [vmem:[#allocation5 + $0x220] sm:$0xff]
        %v320 = vld [vmem:[#allocation5 + $0x228] sm:$0xff]
        %v321 = vld [vmem:[#allocation5 + $0x230] sm:$0xff]
        %v322 = vld [vmem:[#allocation5 + $0x238] sm:$0xff]
        %v323 = vld [vmem:[#allocation5 + $0x240] sm:$0xff]
        %v324 = vld [vmem:[#allocation5 + $0x248] sm:$0xff]
        %v325 = vld [vmem:[#allocation5 + $0x250] sm:$0xff]
        %v326 = vld [vmem:[#allocation5 + $0x258] sm:$0xff]
        %v327 = vld [vmem:[#allocation5 + $0x260] sm:$0xff]
        %v328 = vld [vmem:[#allocation5 + $0x268] sm:$0xff]
        %v329 = vld [vmem:[#allocation5 + $0x270] sm:$0xff]
        %v330 = vld [vmem:[#allocation5 + $0x278] sm:$0xff]
        %v331 = vld [vmem:[#allocation5 + $0x280] sm:$0xff]
        %v332 = vld [vmem:[#allocation5 + $0x288] sm:$0xff]
        %v333 = vld [vmem:[#allocation5 + $0x290] sm:$0xff]
        %v334 = vld [vmem:[#allocation5 + $0x298] sm:$0xff]
        %v335 = vld [vmem:[#allocation5 + $0x2a0] sm:$0xff]
        %v336 = vld [vmem:[#allocation5 + $0x2a8] sm:$0xff]
        %v337 = vld [vmem:[#allocation5 + $0x2b0] sm:$0xff]
        %v338 = vld [vmem:[#allocation5 + $0x2b8] sm:$0xff]
        %v339 = vld [vmem:[#allocation5 + $0x2c0] sm:$0xff]
        %v340 = vld [vmem:[#allocation5 + $0x2c8] sm:$0xff]
        %v341 = vld [vmem:[#allocation5 + $0x2d0] sm:$0xff]
        %v342 = vld [vmem:[#allocation5 + $0x2d8] sm:$0xff]
        %v343 = vld [vmem:[#allocation5 + $0x2e0] sm:$0xff]
        %v344 = vld [vmem:[#allocation5 + $0x2e8] sm:$0xff]
        %v345 = vld [vmem:[#allocation5 + $0x2f0] sm:$0xff]
        %v346 = vld [vmem:[#allocation5 + $0x2f8] sm:$0xff]
        %v347 = vld [vmem:[#allocation5 + $0x300] sm:$0xff]
        %v348 = vld [vmem:[#allocation5 + $0x308] sm:$0xff]
        %v349 = vld [vmem:[#allocation5 + $0x310] sm:$0xff]
        %v350 = vld [vmem:[#allocation5 + $0x318] sm:$0xff]
        %v351 = vld [vmem:[#allocation5 + $0x320] sm:$0xff]
        %v352 = vld [vmem:[#allocation5 + $0x328] sm:$0xff]
        %v353 = vld [vmem:[#allocation5 + $0x330] sm:$0xff]
        %v354 = vld [vmem:[#allocation5 + $0x338] sm:$0xff]
        %v355 = vld [vmem:[#allocation5 + $0x340] sm:$0xff]
        %v356 = vld [vmem:[#allocation5 + $0x348] sm:$0xff]
        %v357 = vld [vmem:[#allocation5 + $0x350] sm:$0xff]
        %v358 = vld [vmem:[#allocation5 + $0x358] sm:$0xff]
        %v359 = vld [vmem:[#allocation5 + $0x360] sm:$0xff]
        %v360 = vld [vmem:[#allocation5 + $0x368] sm:$0xff]
        %v361 = vld [vmem:[#allocation5 + $0x370] sm:$0xff]
        %v362 = vld [vmem:[#allocation5 + $0x378] sm:$0xff]
        %v363 = vld [vmem:[#allocation5 + $0x380] sm:$0xff]
        %v364 = vld [vmem:[#allocation5 + $0x388] sm:$0xff]
        %v365 = vld [vmem:[#allocation5 + $0x390] sm:$0xff]
        %v366 = vld [vmem:[#allocation5 + $0x398] sm:$0xff]
        %v367 = vld [vmem:[#allocation5 + $0x3a0] sm:$0xff]
        %v368 = vld [vmem:[#allocation5 + $0x3a8] sm:$0xff]
        %v369 = vld [vmem:[#allocation5 + $0x3b0] sm:$0xff]
        %v370 = vld [vmem:[#allocation5 + $0x3b8] sm:$0xff]
        %v371 = vld [vmem:[#allocation5 + $0x3c0] sm:$0xff]
        %v372 = vld [vmem:[#allocation5 + $0x3c8] sm:$0xff]
        %v373 = vld [vmem:[#allocation5 + $0x3d0] sm:$0xff]
        %v374 = vld [vmem:[#allocation5 + $0x3d8] sm:$0xff]
        %v375 = vld [vmem:[#allocation5 + $0x3e0] sm:$0xff]
        %v376 = vld [vmem:[#allocation5 + $0x3e8] sm:$0xff]
        %v377 = vld [vmem:[#allocation5 + $0x3f0] sm:$0xff]
        %v378 = vld [vmem:[#allocation5 + $0x3f8] sm:$0xff]
        %v379 = vld [vmem:[#allocation5 + $0x400] sm:$0xff]
        %v380 = vld [vmem:[#allocation5 + $0x408] sm:$0xff]
        %v381 = vld [vmem:[#allocation5 + $0x410] sm:$0xff]
        %v382 = vld [vmem:[#allocation5 + $0x418] sm:$0xff]
        %v383 = vld [vmem:[#allocation5 + $0x420] sm:$0xff]
        %v384 = vld [vmem:[#allocation5 + $0x428] sm:$0xff]
        %v385 = vld [vmem:[#allocation5 + $0x430] sm:$0xff]
        %v386 = vld [vmem:[#allocation5 + $0x438] sm:$0xff]
        %v387 = vld [vmem:[#allocation5 + $0x440] sm:$0xff]
        %v388 = vld [vmem:[#allocation5 + $0x448] sm:$0xff]
        %v389 = vld [vmem:[#allocation5 + $0x450] sm:$0xff]
        %v390 = vld [vmem:[#allocation5 + $0x458] sm:$0xff]
        %v391 = vld [vmem:[#allocation5 + $0x460] sm:$0xff]
        %v392 = vld [vmem:[#allocation5 + $0x468] sm:$0xff]
        %v393 = vld [vmem:[#allocation5 + $0x470] sm:$0xff]
        %v394 = vld [vmem:[#allocation5 + $0x478] sm:$0xff]
        %v395 = vld [vmem:[#allocation5 + $0x480] sm:$0xff]
        %v396 = vld [vmem:[#allocation5 + $0x488] sm:$0xff]
        %v397 = vld [vmem:[#allocation5 + $0x490] sm:$0xff]
        %v398 = vld [vmem:[#allocation5 + $0x498] sm:$0xff]
        %v399 = vld [vmem:[#allocation5 + $0x4a0] sm:$0xff]
        %v400 = vld [vmem:[#allocation5 + $0x4a8] sm:$0xff]
        %v401 = vld [vmem:[#allocation5 + $0x4b0] sm:$0xff]
        %v402 = vld [vmem:[#allocation5 + $0x4b8] sm:$0xff]
        %v403 = vld [vmem:[#allocation5 + $0x4c0] sm:$0xff]
        %v404 = vld [vmem:[#allocation5 + $0x4c8] sm:$0xff]
        %v405 = vld [vmem:[#allocation5 + $0x4d0] sm:$0xff]
        %v406 = vld [vmem:[#allocation5 + $0x4d8] sm:$0xff]
        %v407 = vld [vmem:[#allocation5 + $0x4e0] sm:$0xff]
        %v408 = vld [vmem:[#allocation5 + $0x4e8] sm:$0xff]
        %v409 = vld [vmem:[#allocation5 + $0x4f0] sm:$0xff]
        %v410 = vld [vmem:[#allocation5 + $0x4f8] sm:$0xff]
        %v411 = vld [vmem:[#allocation5 + $0x500] sm:$0xff]
        %v412 = vld [vmem:[#allocation5 + $0x508] sm:$0xff]
        %v413 = vld [vmem:[#allocation5 + $0x510] sm:$0xff]
        %v414 = vld [vmem:[#allocation5 + $0x518] sm:$0xff]
        %v415 = vld [vmem:[#allocation5 + $0x520] sm:$0xff]
        %v416 = vld [vmem:[#allocation5 + $0x528] sm:$0xff]
        %v417 = vld [vmem:[#allocation5 + $0x530] sm:$0xff]
        %v418 = vld [vmem:[#allocation5 + $0x538] sm:$0xff]
        %v419 = vld [vmem:[#allocation5 + $0x540] sm:$0xff]
        %v420 = vld [vmem:[#allocation5 + $0x548] sm:$0xff]
        %v421 = vld [vmem:[#allocation5 + $0x550] sm:$0xff]
        %v422 = vld [vmem:[#allocation5 + $0x558] sm:$0xff]
        %v423 = vld [vmem:[#allocation5 + $0x560] sm:$0xff]
        %v424 = vld [vmem:[#allocation5 + $0x568] sm:$0xff]
        %v425 = vld [vmem:[#allocation5 + $0x570] sm:$0xff]
        %v426 = vld [vmem:[#allocation5 + $0x578] sm:$0xff]
        %v427 = vld [vmem:[#allocation5 + $0x580] sm:$0xff]
        %v428 = vld [vmem:[#allocation5 + $0x588] sm:$0xff]
        %v429 = vld [vmem:[#allocation5 + $0x590] sm:$0xff]
        %v430 = vld [vmem:[#allocation5 + $0x598] sm:$0xff]
        %v431 = vld [vmem:[#allocation5 + $0x5a0] sm:$0xff]
        %v432 = vld [vmem:[#allocation5 + $0x5a8] sm:$0xff]
        %v433 = vld [vmem:[#allocation5 + $0x5b0] sm:$0xff]
        %v434 = vld [vmem:[#allocation5 + $0x5b8] sm:$0xff]
        %v435 = vld [vmem:[#allocation5 + $0x5c0] sm:$0xff]
        %v436 = vld [vmem:[#allocation5 + $0x5c8] sm:$0xff]
        %v437 = vld [vmem:[#allocation5 + $0x5d0] sm:$0xff]
        %v438 = vld [vmem:[#allocation5 + $0x5d8] sm:$0xff]
        %v439 = vld [vmem:[#allocation5 + $0x5e0] sm:$0xff]
        %v440 = vld [vmem:[#allocation5 + $0x5e8] sm:$0xff]
        %v441 = vld [vmem:[#allocation5 + $0x5f0] sm:$0xff]
        %v442 = vld [vmem:[#allocation5 + $0x5f8] sm:$0xff]
        %v443 = vld [vmem:[#allocation5 + $0x600] sm:$0xff]
        %v444 = vld [vmem:[#allocation5 + $0x608] sm:$0xff]
        %v445 = vld [vmem:[#allocation5 + $0x610] sm:$0xff]
        %v446 = vld [vmem:[#allocation5 + $0x618] sm:$0xff]
        %v447 = vld [vmem:[#allocation5 + $0x620] sm:$0xff]
        %v448 = vld [vmem:[#allocation5 + $0x628] sm:$0xff]
        %v449 = vld [vmem:[#allocation5 + $0x630] sm:$0xff]
        %v450 = vld [vmem:[#allocation5 + $0x638] sm:$0xff]
        %v451 = vld [vmem:[#allocation5 + $0x640] sm:$0xff]
        %v452 = vld [vmem:[#allocation5 + $0x648] sm:$0xff]
        %v453 = vld [vmem:[#allocation5 + $0x650] sm:$0xff]
        %v454 = vld [vmem:[#allocation5 + $0x658] sm:$0xff]
        %v455 = vld [vmem:[#allocation5 + $0x660] sm:$0xff]
        %v456 = vld [vmem:[#allocation5 + $0x668] sm:$0xff]
        %v457 = vld [vmem:[#allocation5 + $0x670] sm:$0xff]
        %v458 = vld [vmem:[#allocation5 + $0x678] sm:$0xff]
        %v459 = vld [vmem:[#allocation5 + $0x680] sm:$0xff]
        %v460 = vld [vmem:[#allocation5 + $0x688] sm:$0xff]
        %v461 = vld [vmem:[#allocation5 + $0x690] sm:$0xff]
        %v462 = vld [vmem:[#allocation5 + $0x698] sm:$0xff]
        %v463 = vld [vmem:[#allocation5 + $0x6a0] sm:$0xff]
        %v464 = vld [vmem:[#allocation5 + $0x6a8] sm:$0xff]
        %v465 = vld [vmem:[#allocation5 + $0x6b0] sm:$0xff]
        %v466 = vld [vmem:[#allocation5 + $0x6b8] sm:$0xff]
        %v467 = vld [vmem:[#allocation5 + $0x6c0] sm:$0xff]
        %v468 = vld [vmem:[#allocation5 + $0x6c8] sm:$0xff]
        %v469 = vld [vmem:[#allocation5 + $0x6d0] sm:$0xff]
        %v470 = vld [vmem:[#allocation5 + $0x6d8] sm:$0xff]
        %v471 = vld [vmem:[#allocation5 + $0x6e0] sm:$0xff]
        %v472 = vld [vmem:[#allocation5 + $0x6e8] sm:$0xff]
        %v473 = vld [vmem:[#allocation5 + $0x6f0] sm:$0xff]
        %v474 = vld [vmem:[#allocation5 + $0x6f8] sm:$0xff]
        %v475 = vld [vmem:[#allocation5 + $0x700] sm:$0xff]
        %v476 = vld [vmem:[#allocation5 + $0x708] sm:$0xff]
        %v477 = vld [vmem:[#allocation5 + $0x710] sm:$0xff]
        %v478 = vld [vmem:[#allocation5 + $0x718] sm:$0xff]
        %v479 = vld [vmem:[#allocation5 + $0x720] sm:$0xff]
        %v480 = vld [vmem:[#allocation5 + $0x728] sm:$0xff]
        %v481 = vld [vmem:[#allocation5 + $0x730] sm:$0xff]
        %v482 = vld [vmem:[#allocation5 + $0x738] sm:$0xff]
        %v483 = vld [vmem:[#allocation5 + $0x740] sm:$0xff]
        %v484 = vld [vmem:[#allocation5 + $0x748] sm:$0xff]
        %v485 = vld [vmem:[#allocation5 + $0x750] sm:$0xff]
        %v486 = vld [vmem:[#allocation5 + $0x758] sm:$0xff]
        %v487 = vld [vmem:[#allocation5 + $0x760] sm:$0xff]
        %v488 = vld [vmem:[#allocation5 + $0x768] sm:$0xff]
        %v489 = vld [vmem:[#allocation5 + $0x770] sm:$0xff]
        %v490 = vld [vmem:[#allocation5 + $0x778] sm:$0xff]
        %v491 = vld [vmem:[#allocation5 + $0x780] sm:$0xff]
        %v492 = vld [vmem:[#allocation5 + $0x788] sm:$0xff]
        %v493 = vld [vmem:[#allocation5 + $0x790] sm:$0xff]
        %v494 = vld [vmem:[#allocation5 + $0x798] sm:$0xff]
        %v495 = vld [vmem:[#allocation5 + $0x7a0] sm:$0xff]
        %v496 = vld [vmem:[#allocation5 + $0x7a8] sm:$0xff]
        %v497 = vld [vmem:[#allocation5 + $0x7b0] sm:$0xff]
        %v498 = vld [vmem:[#allocation5 + $0x7b8] sm:$0xff]
        %v499 = vld [vmem:[#allocation5 + $0x7c0] sm:$0xff]
        %v500 = vld [vmem:[#allocation5 + $0x7c8] sm:$0xff]
        %v501 = vld [vmem:[#allocation5 + $0x7d0] sm:$0xff]
        %v502 = vld [vmem:[#allocation5 + $0x7d8] sm:$0xff]
        %v503 = vld [vmem:[#allocation5 + $0x7e0] sm:$0xff]
        %v504 = vld [vmem:[#allocation5 + $0x7e8] sm:$0xff]
        %v505 = vld [vmem:[#allocation5 + $0x7f0] sm:$0xff]
        %v506 = vld [vmem:[#allocation5 + $0x7f8] sm:$0xff]
        %v507 = vld [vmem:[#allocation5 + $0x800] sm:$0xff]
        %v508 = vld [vmem:[#allocation5 + $0x808] sm:$0xff]
        %v509 = vld [vmem:[#allocation5 + $0x810] sm:$0xff]
        %v510 = vld [vmem:[#allocation5 + $0x818] sm:$0xff]
        %v511 = vld [vmem:[#allocation5 + $0x820] sm:$0xff]
        %v512 = vld [vmem:[#allocation5 + $0x828] sm:$0xff]
        %v513 = vld [vmem:[#allocation5 + $0x830] sm:$0xff]
        %v514 = vld [vmem:[#allocation5 + $0x838] sm:$0xff]
        %v515 = vld [vmem:[#allocation5 + $0x840] sm:$0xff]
        %v516 = vld [vmem:[#allocation5 + $0x848] sm:$0xff]
        %v517 = vld [vmem:[#allocation5 + $0x850] sm:$0xff]
        %v518 = vld [vmem:[#allocation5 + $0x858] sm:$0xff]
        %v519 = vld [vmem:[#allocation5 + $0x860] sm:$0xff]
        %v520 = vld [vmem:[#allocation5 + $0x868] sm:$0xff]
        %v521 = vld [vmem:[#allocation5 + $0x870] sm:$0xff]
        %v522 = vld [vmem:[#allocation5 + $0x878] sm:$0xff]
        %v523 = vld [vmem:[#allocation5 + $0x880] sm:$0xff]
        %v524 = vld [vmem:[#allocation5 + $0x888] sm:$0xff]
        %v525 = vld [vmem:[#allocation5 + $0x890] sm:$0xff]
        %v526 = vld [vmem:[#allocation5 + $0x898] sm:$0xff]
        %v527 = vld [vmem:[#allocation5 + $0x8a0] sm:$0xff]
        %v528 = vld [vmem:[#allocation5 + $0x8a8] sm:$0xff]
        %v529 = vld [vmem:[#allocation5 + $0x8b0] sm:$0xff]
        %v530 = vld [vmem:[#allocation5 + $0x8b8] sm:$0xff]
        %v531 = vld [vmem:[#allocation5 + $0x8c0] sm:$0xff]
        %v532 = vld [vmem:[#allocation5 + $0x8c8] sm:$0xff]
        %v533 = vld [vmem:[#allocation5 + $0x8d0] sm:$0xff]
        %v534 = vld [vmem:[#allocation5 + $0x8d8] sm:$0xff]
        %v535 = vld [vmem:[#allocation5 + $0x8e0] sm:$0xff]
        %v536 = vld [vmem:[#allocation5 + $0x8e8] sm:$0xff]
        %v537 = vld [vmem:[#allocation5 + $0x8f0] sm:$0xff]
        %v538 = vld [vmem:[#allocation5 + $0x8f8] sm:$0xff]
        %v539 = vld [vmem:[#allocation5 + $0x900] sm:$0xff]
        %v540 = vld [vmem:[#allocation5 + $0x908] sm:$0xff]
        %v541 = vld [vmem:[#allocation5 + $0x910] sm:$0xff]
        %v542 = vld [vmem:[#allocation5 + $0x918] sm:$0xff]
        %v543 = vld [vmem:[#allocation5 + $0x920] sm:$0xff]
        %v544 = vld [vmem:[#allocation5 + $0x928] sm:$0xff]
        %v545 = vld [vmem:[#allocation5 + $0x930] sm:$0xff]
        %v546 = vld [vmem:[#allocation5 + $0x938] sm:$0xff]
        %v547 = vld [vmem:[#allocation5 + $0x940] sm:$0xff]
        %v548 = vld [vmem:[#allocation5 + $0x948] sm:$0xff]
        %v549 = vld [vmem:[#allocation5 + $0x950] sm:$0xff]
        %v550 = vld [vmem:[#allocation5 + $0x958] sm:$0xff]
        %v551 = vld [vmem:[#allocation5 + $0x960] sm:$0xff]
        %v552 = vld [vmem:[#allocation5 + $0x968] sm:$0xff]
        %v553 = vld [vmem:[#allocation5 + $0x970] sm:$0xff]
        %v554 = vld [vmem:[#allocation5 + $0x978] sm:$0xff]
        %v555 = vld [vmem:[#allocation5 + $0x980] sm:$0xff]
        %v556 = vld [vmem:[#allocation5 + $0x988] sm:$0xff]
        %v557 = vld [vmem:[#allocation5 + $0x990] sm:$0xff]
        %v558 = vld [vmem:[#allocation5 + $0x998] sm:$0xff]
        %v559 = vld [vmem:[#allocation5 + $0x9a0] sm:$0xff]
        %v560 = vld [vmem:[#allocation5 + $0x9a8] sm:$0xff]
        %v561 = vld [vmem:[#allocation5 + $0x9b0] sm:$0xff]
        %v562 = vld [vmem:[#allocation5 + $0x9b8] sm:$0xff]
        %v563 = vld [vmem:[#allocation5 + $0x9c0] sm:$0xff]
        %v564 = vld [vmem:[#allocation5 + $0x9c8] sm:$0xff]
        %v565 = vld [vmem:[#allocation5 + $0x9d0] sm:$0xff]
        %v566 = vld [vmem:[#allocation5 + $0x9d8] sm:$0xff]
        %v567 = vld [vmem:[#allocation5 + $0x9e0] sm:$0xff]
        %v568 = vld [vmem:[#allocation5 + $0x9e8] sm:$0xff]
        %v569 = vld [vmem:[#allocation5 + $0x9f0] sm:$0xff]
        %v570 = vld [vmem:[#allocation5 + $0x9f8] sm:$0xff]
        %v571 = vld [vmem:[#allocation5 + $0xa00] sm:$0xff]
        %v572 = vld [vmem:[#allocation5 + $0xa08] sm:$0xff]
        %v573 = vld [vmem:[#allocation5 + $0xa10] sm:$0xff]
        %v574 = vld [vmem:[#allocation5 + $0xa18] sm:$0xff]
        %v575 = vld [vmem:[#allocation5 + $0xa20] sm:$0xff]
        %v576 = vld [vmem:[#allocation5 + $0xa28] sm:$0xff]
        %v577 = vld [vmem:[#allocation5 + $0xa30] sm:$0xff]
        %v578 = vld [vmem:[#allocation5 + $0xa38] sm:$0xff]
        %v579 = vld [vmem:[#allocation5 + $0xa40] sm:$0xff]
        %v580 = vld [vmem:[#allocation5 + $0xa48] sm:$0xff]
        %v581 = vld [vmem:[#allocation5 + $0xa50] sm:$0xff]
        %v582 = vld [vmem:[#allocation5 + $0xa58] sm:$0xff]
        %v583 = vld [vmem:[#allocation5 + $0xa60] sm:$0xff]
        %v584 = vld [vmem:[#allocation5 + $0xa68] sm:$0xff]
        %v585 = vld [vmem:[#allocation5 + $0xa70] sm:$0xff]
        %v586 = vld [vmem:[#allocation5 + $0xa78] sm:$0xff]
        %v587 = vld [vmem:[#allocation5 + $0xa80] sm:$0xff]
        %v588 = vld [vmem:[#allocation5 + $0xa88] sm:$0xff]
        %v589 = vld [vmem:[#allocation5 + $0xa90] sm:$0xff]
        %v590 = vld [vmem:[#allocation5 + $0xa98] sm:$0xff]
        %v591 = vld [vmem:[#allocation5 + $0xaa0] sm:$0xff]
        %v592 = vld [vmem:[#allocation5 + $0xaa8] sm:$0xff]
        %v593 = vld [vmem:[#allocation5 + $0xab0] sm:$0xff]
        %v594 = vld [vmem:[#allocation5 + $0xab8] sm:$0xff]
        %v595 = vld [vmem:[#allocation5 + $0xac0] sm:$0xff]
        %v596 = vld [vmem:[#allocation5 + $0xac8] sm:$0xff]
        %v597 = vld [vmem:[#allocation5 + $0xad0] sm:$0xff]
        %v598 = vld [vmem:[#allocation5 + $0xad8] sm:$0xff]
        %v599 = vld [vmem:[#allocation5 + $0xae0] sm:$0xff]
        %v600 = vld [vmem:[#allocation5 + $0xae8] sm:$0xff]
        %v601 = vld [vmem:[#allocation5 + $0xaf0] sm:$0xff]
        %v602 = vld [vmem:[#allocation5 + $0xaf8] sm:$0xff]
        %v603 = vld [vmem:[#allocation5 + $0xb00] sm:$0xff]
        %v604 = vld [vmem:[#allocation5 + $0xb08] sm:$0xff]
        %v605 = vld [vmem:[#allocation5 + $0xb10] sm:$0xff]
        %v606 = vld [vmem:[#allocation5 + $0xb18] sm:$0xff]
        %v607 = vld [vmem:[#allocation5 + $0xb20] sm:$0xff]
        %v608 = vld [vmem:[#allocation5 + $0xb28] sm:$0xff]
        %v609 = vld [vmem:[#allocation5 + $0xb30] sm:$0xff]
        %v610 = vld [vmem:[#allocation5 + $0xb38] sm:$0xff]
        %v611 = vld [vmem:[#allocation5 + $0xb40] sm:$0xff]
        %v612 = vld [vmem:[#allocation5 + $0xb48] sm:$0xff]
        %v613 = vld [vmem:[#allocation5 + $0xb50] sm:$0xff]
        %v614 = vld [vmem:[#allocation5 + $0xb58] sm:$0xff]
        %v615 = vld [vmem:[#allocation5 + $0xb60] sm:$0xff]
        %v616 = vld [vmem:[#allocation5 + $0xb68] sm:$0xff]
        %v617 = vld [vmem:[#allocation5 + $0xb70] sm:$0xff]
        %v618 = vld [vmem:[#allocation5 + $0xb78] sm:$0xff]
        %v619 = vld [vmem:[#allocation5 + $0xb80] sm:$0xff]
        %v620 = vld [vmem:[#allocation5 + $0xb88] sm:$0xff]
        %v621 = vld [vmem:[#allocation5 + $0xb90] sm:$0xff]
        %v622 = vld [vmem:[#allocation5 + $0xb98] sm:$0xff]
        %v623 = vld [vmem:[#allocation5 + $0xba0] sm:$0xff]
        %v624 = vld [vmem:[#allocation5 + $0xba8] sm:$0xff]
        %v625 = vld [vmem:[#allocation5 + $0xbb0] sm:$0xff]
        %v626 = vld [vmem:[#allocation5 + $0xbb8] sm:$0xff]
        %v627 = vld [vmem:[#allocation5 + $0xbc0] sm:$0xff]
        %v628 = vld [vmem:[#allocation5 + $0xbc8] sm:$0xff]
        %v629 = vld [vmem:[#allocation5 + $0xbd0] sm:$0xff]
        %v630 = vld [vmem:[#allocation5 + $0xbd8] sm:$0xff]
        %v631 = vld [vmem:[#allocation5 + $0xbe0] sm:$0xff]
        %v632 = vld [vmem:[#allocation5 + $0xbe8] sm:$0xff]
        %v633 = vld [vmem:[#allocation5 + $0xbf0] sm:$0xff]
        %v634 = vld [vmem:[#allocation5 + $0xbf8] sm:$0xff]
        %v635 = vld [vmem:[#allocation5 + $0xc00] sm:$0xff]
        %v636 = vld [vmem:[#allocation5 + $0xc08] sm:$0xff]
        %v637 = vld [vmem:[#allocation5 + $0xc10] sm:$0xff]
        %v638 = vld [vmem:[#allocation5 + $0xc18] sm:$0xff]
        %v639 = vld [vmem:[#allocation5 + $0xc20] sm:$0xff]
        %v640 = vld [vmem:[#allocation5 + $0xc28] sm:$0xff]
        %v641 = vld [vmem:[#allocation5 + $0xc30] sm:$0xff]
        %v642 = vld [vmem:[#allocation5 + $0xc38] sm:$0xff]
        %v643 = vld [vmem:[#allocation5 + $0xc40] sm:$0xff]
        %v644 = vld [vmem:[#allocation5 + $0xc48] sm:$0xff]
        %v645 = vld [vmem:[#allocation5 + $0xc50] sm:$0xff]
        %v646 = vld [vmem:[#allocation5 + $0xc58] sm:$0xff]
        %v647 = vld [vmem:[#allocation5 + $0xc60] sm:$0xff]
        %v648 = vld [vmem:[#allocation5 + $0xc68] sm:$0xff]
        %v649 = vld [vmem:[#allocation5 + $0xc70] sm:$0xff]
        %v650 = vld [vmem:[#allocation5 + $0xc78] sm:$0xff]
        %v651 = vld [vmem:[#allocation5 + $0xc80] sm:$0xff]
        %v652 = vld [vmem:[#allocation5 + $0xc88] sm:$0xff]
        %v653 = vld [vmem:[#allocation5 + $0xc90] sm:$0xff]
        %v654 = vld [vmem:[#allocation5 + $0xc98] sm:$0xff]
        %v655 = vld [vmem:[#allocation5 + $0xca0] sm:$0xff]
        %v656 = vld [vmem:[#allocation5 + $0xca8] sm:$0xff]
        %v657 = vld [vmem:[#allocation5 + $0xcb0] sm:$0xff]
        %v658 = vld [vmem:[#allocation5 + $0xcb8] sm:$0xff]
        %v659 = vld [vmem:[#allocation5 + $0xcc0] sm:$0xff]
        %v660 = vld [vmem:[#allocation5 + $0xcc8] sm:$0xff]
        %v661 = vld [vmem:[#allocation5 + $0xcd0] sm:$0xff]
        %v662 = vld [vmem:[#allocation5 + $0xcd8] sm:$0xff]
        %v663 = vld [vmem:[#allocation5 + $0xce0] sm:$0xff]
        %v664 = vld [vmem:[#allocation5 + $0xce8] sm:$0xff]
        %v665 = vld [vmem:[#allocation5 + $0xcf0] sm:$0xff]
        %v666 = vld [vmem:[#allocation5 + $0xcf8] sm:$0xff]
        %v667 = vld [vmem:[#allocation5 + $0xd00] sm:$0xff]
        %v668 = vld [vmem:[#allocation5 + $0xd08] sm:$0xff]
        %v669 = vld [vmem:[#allocation5 + $0xd10] sm:$0xff]
        %v670 = vld [vmem:[#allocation5 + $0xd18] sm:$0xff]
        %v671 = vld [vmem:[#allocation5 + $0xd20] sm:$0xff]
        %v672 = vld [vmem:[#allocation5 + $0xd28] sm:$0xff]
        %v673 = vld [vmem:[#allocation5 + $0xd30] sm:$0xff]
        %v674 = vld [vmem:[#allocation5 + $0xd38] sm:$0xff]
        %v675 = vld [vmem:[#allocation5 + $0xd40] sm:$0xff]
        %v676 = vld [vmem:[#allocation5 + $0xd48] sm:$0xff]
        %v677 = vld [vmem:[#allocation5 + $0xd50] sm:$0xff]
        %v678 = vld [vmem:[#allocation5 + $0xd58] sm:$0xff]
        %v679 = vld [vmem:[#allocation5 + $0xd60] sm:$0xff]
        %v680 = vld [vmem:[#allocation5 + $0xd68] sm:$0xff]
        %v681 = vld [vmem:[#allocation5 + $0xd70] sm:$0xff]
        %v682 = vld [vmem:[#allocation5 + $0xd78] sm:$0xff]
        %v683 = vld [vmem:[#allocation5 + $0xd80] sm:$0xff]
        %v684 = vld [vmem:[#allocation5 + $0xd88] sm:$0xff]
        %v685 = vld [vmem:[#allocation5 + $0xd90] sm:$0xff]
        %v686 = vld [vmem:[#allocation5 + $0xd98] sm:$0xff]
        %v687 = vld [vmem:[#allocation5 + $0xda0] sm:$0xff]
        %v688 = vld [vmem:[#allocation5 + $0xda8] sm:$0xff]
        %v689 = vld [vmem:[#allocation5 + $0xdb0] sm:$0xff]
        %v690 = vld [vmem:[#allocation5 + $0xdb8] sm:$0xff]
        %v691 = vld [vmem:[#allocation5 + $0xdc0] sm:$0xff]
        %v692 = vld [vmem:[#allocation5 + $0xdc8] sm:$0xff]
        %v693 = vld [vmem:[#allocation5 + $0xdd0] sm:$0xff]
        %v694 = vld [vmem:[#allocation5 + $0xdd8] sm:$0xff]
        %v695 = vld [vmem:[#allocation5 + $0xde0] sm:$0xff]
        %v696 = vld [vmem:[#allocation5 + $0xde8] sm:$0xff]
        %v697 = vld [vmem:[#allocation5 + $0xdf0] sm:$0xff]
        %v698 = vld [vmem:[#allocation5 + $0xdf8] sm:$0xff]
        %v699 = vld [vmem:[#allocation5 + $0xe00] sm:$0xff]
        %v700 = vld [vmem:[#allocation5 + $0xe08] sm:$0xff]
        %v701 = vld [vmem:[#allocation5 + $0xe10] sm:$0xff]
        %v702 = vld [vmem:[#allocation5 + $0xe18] sm:$0xff]
        %v703 = vld [vmem:[#allocation5 + $0xe20] sm:$0xff]
        %v704 = vld [vmem:[#allocation5 + $0xe28] sm:$0xff]
        %v705 = vld [vmem:[#allocation5 + $0xe30] sm:$0xff]
        %v706 = vld [vmem:[#allocation5 + $0xe38] sm:$0xff]
        %v707 = vld [vmem:[#allocation5 + $0xe40] sm:$0xff]
        %v708 = vld [vmem:[#allocation5 + $0xe48] sm:$0xff]
        %v709 = vld [vmem:[#allocation5 + $0xe50] sm:$0xff]
        %v710 = vld [vmem:[#allocation5 + $0xe58] sm:$0xff]
        %v711 = vld [vmem:[#allocation5 + $0xe60] sm:$0xff]
        %v712 = vld [vmem:[#allocation5 + $0xe68] sm:$0xff]
        %v713 = vld [vmem:[#allocation5 + $0xe70] sm:$0xff]
        %v714 = vld [vmem:[#allocation5 + $0xe78] sm:$0xff]
        %v715 = vld [vmem:[#allocation5 + $0xe80] sm:$0xff]
        %v716 = vld [vmem:[#allocation5 + $0xe88] sm:$0xff]
        %v717 = vld [vmem:[#allocation5 + $0xe90] sm:$0xff]
        %v718 = vld [vmem:[#allocation5 + $0xe98] sm:$0xff]
        %v719 = vld [vmem:[#allocation5 + $0xea0] sm:$0xff]
        %v720 = vld [vmem:[#allocation5 + $0xea8] sm:$0xff]
        %v721 = vld [vmem:[#allocation5 + $0xeb0] sm:$0xff]
        %v722 = vld [vmem:[#allocation5 + $0xeb8] sm:$0xff]
        %v723 = vld [vmem:[#allocation5 + $0xec0] sm:$0xff]
        %v724 = vld [vmem:[#allocation5 + $0xec8] sm:$0xff]
        %v725 = vld [vmem:[#allocation5 + $0xed0] sm:$0xff]
        %v726 = vld [vmem:[#allocation5 + $0xed8] sm:$0xff]
        %v727 = vld [vmem:[#allocation5 + $0xee0] sm:$0xff]
        %v728 = vld [vmem:[#allocation5 + $0xee8] sm:$0xff]
        %v729 = vld [vmem:[#allocation5 + $0xef0] sm:$0xff]
        %v730 = vld [vmem:[#allocation5 + $0xef8] sm:$0xff]
        %v731 = vld [vmem:[#allocation5 + $0xf00] sm:$0xff]
        %v732 = vld [vmem:[#allocation5 + $0xf08] sm:$0xff]
        %v733 = vld [vmem:[#allocation5 + $0xf10] sm:$0xff]
        %v734 = vld [vmem:[#allocation5 + $0xf18] sm:$0xff]
        %v735 = vld [vmem:[#allocation5 + $0xf20] sm:$0xff]
        %v736 = vld [vmem:[#allocation5 + $0xf28] sm:$0xff]
        %v737 = vld [vmem:[#allocation5 + $0xf30] sm:$0xff]
        %v738 = vld [vmem:[#allocation5 + $0xf38] sm:$0xff]
        %v739 = vld [vmem:[#allocation5 + $0xf40] sm:$0xff]
        %v740 = vld [vmem:[#allocation5 + $0xf48] sm:$0xff]
        %v741 = vld [vmem:[#allocation5 + $0xf50] sm:$0xff]
        %v742 = vld [vmem:[#allocation5 + $0xf58] sm:$0xff]
        %v743 = vld [vmem:[#allocation5 + $0xf60] sm:$0xff]
        %v744 = vld [vmem:[#allocation5 + $0xf68] sm:$0xff]
        %v745 = vld [vmem:[#allocation5 + $0xf70] sm:$0xff]
        %v746 = vld [vmem:[#allocation5 + $0xf78] sm:$0xff]
        %v747 = vld [vmem:[#allocation5 + $0xf80] sm:$0xff]
        %v748 = vld [vmem:[#allocation5 + $0xf88] sm:$0xff]
        %v749 = vld [vmem:[#allocation5 + $0xf90] sm:$0xff]
        %v750 = vld [vmem:[#allocation5 + $0xf98] sm:$0xff]
        %v751 = vld [vmem:[#allocation5 + $0xfa0] sm:$0xff]
        %v752 = vld [vmem:[#allocation5 + $0xfa8] sm:$0xff]
        %v753 = vld [vmem:[#allocation5 + $0xfb0] sm:$0xff]
        %v754 = vld [vmem:[#allocation5 + $0xfb8] sm:$0xff]
        %v755 = vld [vmem:[#allocation5 + $0xfc0] sm:$0xff]
        %v756 = vld [vmem:[#allocation5 + $0xfc8] sm:$0xff]
        %v757 = vld [vmem:[#allocation5 + $0xfd0] sm:$0xff]
        %v758 = vld [vmem:[#allocation5 + $0xfd8] sm:$0xff]
        %v759 = vld [vmem:[#allocation5 + $0xfe0] sm:$0xff]
        %v760 = vld [vmem:[#allocation5 + $0xfe8] sm:$0xff]
        %v761 = vld [vmem:[#allocation5 + $0xff0] sm:$0xff]
        %v762 = vld [vmem:[#allocation5 + $0xff8] sm:$0xff]
        %v763 = vld [vmem:[#allocation5 + $0x1000] sm:$0xff]
        %v764 = vld [vmem:[#allocation5 + $0x1008] sm:$0xff]
        %v765 = vld [vmem:[#allocation5 + $0x1010] sm:$0xff]
        %v766 = vld [vmem:[#allocation5 + $0x1018] sm:$0xff]
        %v767 = vld [vmem:[#allocation5 + $0x1020] sm:$0xff]
        %v768 = vld [vmem:[#allocation5 + $0x1028] sm:$0xff]
        %v769 = vld [vmem:[#allocation5 + $0x1030] sm:$0xff]
        %v770 = vld [vmem:[#allocation5 + $0x1038] sm:$0xff]
        %v771 = vld [vmem:[#allocation5 + $0x1040] sm:$0xff]
        %v772 = vld [vmem:[#allocation5 + $0x1048] sm:$0xff]
        %v773 = vld [vmem:[#allocation5 + $0x1050] sm:$0xff]
        %v774 = vld [vmem:[#allocation5 + $0x1058] sm:$0xff]
        %v775 = vld [vmem:[#allocation5 + $0x1060] sm:$0xff]
        %v776 = vld [vmem:[#allocation5 + $0x1068] sm:$0xff]
        %v777 = vld [vmem:[#allocation5 + $0x1070] sm:$0xff]
        %v778 = vld [vmem:[#allocation5 + $0x1078] sm:$0xff]
        %v779 = vld [vmem:[#allocation5 + $0x1080] sm:$0xff]
        %v780 = vld [vmem:[#allocation5 + $0x1088] sm:$0xff]
        %v781 = vld [vmem:[#allocation5 + $0x1090] sm:$0xff]
        %v782 = vld [vmem:[#allocation5 + $0x1098] sm:$0xff]
        %v783 = vld [vmem:[#allocation5 + $0x10a0] sm:$0xff]
        %v784 = vld [vmem:[#allocation5 + $0x10a8] sm:$0xff]
        %v785 = vld [vmem:[#allocation5 + $0x10b0] sm:$0xff]
        %v786 = vld [vmem:[#allocation5 + $0x10b8] sm:$0xff]
        %v787 = vld [vmem:[#allocation5 + $0x10c0] sm:$0xff]
        %v788 = vld [vmem:[#allocation5 + $0x10c8] sm:$0xff]
        %v789 = vld [vmem:[#allocation5 + $0x10d0] sm:$0xff]
        %v790 = vld [vmem:[#allocation5 + $0x10d8] sm:$0xff]
        %v791 = vld [vmem:[#allocation5 + $0x10e0] sm:$0xff]
        %v792 = vld [vmem:[#allocation5 + $0x10e8] sm:$0xff]
        %v793 = vld [vmem:[#allocation5 + $0x10f0] sm:$0xff]
        %v794 = vld [vmem:[#allocation5 + $0x10f8] sm:$0xff]
        %v795 = vld [vmem:[#allocation5 + $0x1100] sm:$0xff]
        %v796 = vld [vmem:[#allocation5 + $0x1108] sm:$0xff]
        %v797 = vld [vmem:[#allocation5 + $0x1110] sm:$0xff]
        %v798 = vld [vmem:[#allocation5 + $0x1118] sm:$0xff]
        %v799 = vld [vmem:[#allocation5 + $0x1120] sm:$0xff]
        %v800 = vld [vmem:[#allocation5 + $0x1128] sm:$0xff]
        %v801 = vld [vmem:[#allocation5 + $0x1130] sm:$0xff]
        %v802 = vld [vmem:[#allocation5 + $0x1138] sm:$0xff]
        %v803 = vld [vmem:[#allocation5 + $0x1140] sm:$0xff]
        %v804 = vld [vmem:[#allocation5 + $0x1148] sm:$0xff]
        %v805 = vld [vmem:[#allocation5 + $0x1150] sm:$0xff]
        %v806 = vld [vmem:[#allocation5 + $0x1158] sm:$0xff]
        %v807 = vld [vmem:[#allocation5 + $0x1160] sm:$0xff]
        %v808 = vld [vmem:[#allocation5 + $0x1168] sm:$0xff]
        %v809 = vld [vmem:[#allocation5 + $0x1170] sm:$0xff]
        %v810 = vld [vmem:[#allocation5 + $0x1178] sm:$0xff]
        %v811 = vld [vmem:[#allocation5 + $0x1180] sm:$0xff]
        %v812 = vld [vmem:[#allocation5 + $0x1188] sm:$0xff]
        %v813 = vld [vmem:[#allocation5 + $0x1190] sm:$0xff]
        %v814 = vld [vmem:[#allocation5 + $0x1198] sm:$0xff]
        %v815 = vld [vmem:[#allocation5 + $0x11a0] sm:$0xff]
        %v816 = vld [vmem:[#allocation5 + $0x11a8] sm:$0xff]
        %v817 = vld [vmem:[#allocation5 + $0x11b0] sm:$0xff]
        %v818 = vld [vmem:[#allocation5 + $0x11b8] sm:$0xff]
        %v819 = vld [vmem:[#allocation5 + $0x11c0] sm:$0xff]
        %v820 = vld [vmem:[#allocation5 + $0x11c8] sm:$0xff]
        %v821 = vld [vmem:[#allocation5 + $0x11d0] sm:$0xff]
        %v822 = vld [vmem:[#allocation5 + $0x11d8] sm:$0xff]
        %v823 = vld [vmem:[#allocation5 + $0x11e0] sm:$0xff]
        %v824 = vld [vmem:[#allocation5 + $0x11e8] sm:$0xff]
        %v825 = vld [vmem:[#allocation5 + $0x11f0] sm:$0xff]
        %v826 = vld [vmem:[#allocation5 + $0x11f8] sm:$0xff]
        %v827 = vld [vmem:[#allocation5 + $0x1200] sm:$0xff]
        %v828 = vld [vmem:[#allocation5 + $0x1208] sm:$0xff]
        %v829 = vld [vmem:[#allocation5 + $0x1210] sm:$0xff]
        %v830 = vld [vmem:[#allocation5 + $0x1218] sm:$0xff]
        %v831 = vld [vmem:[#allocation5 + $0x1220] sm:$0xff]
        %v832 = vld [vmem:[#allocation5 + $0x1228] sm:$0xff]
        %v833 = vld [vmem:[#allocation5 + $0x1230] sm:$0xff]
        %v834 = vld [vmem:[#allocation5 + $0x1238] sm:$0xff]
        %v835 = vld [vmem:[#allocation5 + $0x1240] sm:$0xff]
        %v836 = vld [vmem:[#allocation5 + $0x1248] sm:$0xff]
        %v837 = vld [vmem:[#allocation5 + $0x1250] sm:$0xff]
        %v838 = vld [vmem:[#allocation5 + $0x1258] sm:$0xff]
        %v839 = vld [vmem:[#allocation5 + $0x1260] sm:$0xff]
        %v840 = vld [vmem:[#allocation5 + $0x1268] sm:$0xff]
        %v841 = vld [vmem:[#allocation5 + $0x1270] sm:$0xff]
        %v842 = vld [vmem:[#allocation5 + $0x1278] sm:$0xff]
        %v843 = vld [vmem:[#allocation5 + $0x1280] sm:$0xff]
        %v844 = vld [vmem:[#allocation5 + $0x1288] sm:$0xff]
        %v845 = vld [vmem:[#allocation5 + $0x1290] sm:$0xff]
        %v846 = vld [vmem:[#allocation5 + $0x1298] sm:$0xff]
        %v847 = vld [vmem:[#allocation5 + $0x12a0] sm:$0xff]
        %v848 = vld [vmem:[#allocation5 + $0x12a8] sm:$0xff]
        %v849 = vld [vmem:[#allocation5 + $0x12b0] sm:$0xff]
        %v850 = vld [vmem:[#allocation5 + $0x12b8] sm:$0xff]
        %v851 = vld [vmem:[#allocation5 + $0x12c0] sm:$0xff]
        %v852 = vld [vmem:[#allocation5 + $0x12c8] sm:$0xff]
        %v853 = vld [vmem:[#allocation5 + $0x12d0] sm:$0xff]
        %v854 = vld [vmem:[#allocation5 + $0x12d8] sm:$0xff]
        %v855 = vld [vmem:[#allocation5 + $0x12e0] sm:$0xff]
        %v856 = vld [vmem:[#allocation5 + $0x12e8] sm:$0xff]
        %v857 = vld [vmem:[#allocation5 + $0x12f0] sm:$0xff]
        %v858 = vld [vmem:[#allocation5 + $0x12f8] sm:$0xff]
        %v859 = vld [vmem:[#allocation5 + $0x1300] sm:$0xff]
        %v860 = vld [vmem:[#allocation5 + $0x1308] sm:$0xff]
        %v861 = vld [vmem:[#allocation5 + $0x1310] sm:$0xff]
        %v862 = vld [vmem:[#allocation5 + $0x1318] sm:$0xff]
        %v863 = vld [vmem:[#allocation5 + $0x1320] sm:$0xff]
        %v864 = vld [vmem:[#allocation5 + $0x1328] sm:$0xff]
        %v865 = vld [vmem:[#allocation5 + $0x1330] sm:$0xff]
        %v866 = vld [vmem:[#allocation5 + $0x1338] sm:$0xff]
        %v867 = vld [vmem:[#allocation5 + $0x1340] sm:$0xff]
        %v868 = vld [vmem:[#allocation5 + $0x1348] sm:$0xff]
        %v869 = vld [vmem:[#allocation5 + $0x1350] sm:$0xff]
        %v870 = vld [vmem:[#allocation5 + $0x1358] sm:$0xff]
        %v871 = vld [vmem:[#allocation5 + $0x1360] sm:$0xff]
        %v872 = vld [vmem:[#allocation5 + $0x1368] sm:$0xff]
        %v873 = vld [vmem:[#allocation5 + $0x1370] sm:$0xff]
        %v874 = vld [vmem:[#allocation5 + $0x1378] sm:$0xff]
        %v875 = vld [vmem:[#allocation5 + $0x1380] sm:$0xff]
        %v876 = vld [vmem:[#allocation5 + $0x1388] sm:$0xff]
        %v877 = vld [vmem:[#allocation5 + $0x1390] sm:$0xff]
        %v878 = vld [vmem:[#allocation5 + $0x1398] sm:$0xff]
        %v879 = vld [vmem:[#allocation5 + $0x13a0] sm:$0xff]
        %v880 = vld [vmem:[#allocation5 + $0x13a8] sm:$0xff]
        %v881 = vld [vmem:[#allocation5 + $0x13b0] sm:$0xff]
        %v882 = vld [vmem:[#allocation5 + $0x13b8] sm:$0xff]
        %v883 = vld [vmem:[#allocation5 + $0x13c0] sm:$0xff]
        %v884 = vld [vmem:[#allocation5 + $0x13c8] sm:$0xff]
        %v885 = vld [vmem:[#allocation5 + $0x13d0] sm:$0xff]
        %v886 = vld [vmem:[#allocation5 + $0x13d8] sm:$0xff]
        %v887 = vld [vmem:[#allocation5 + $0x13e0] sm:$0xff]
        %v888 = vld [vmem:[#allocation5 + $0x13e8] sm:$0xff]
        %v889 = vld [vmem:[#allocation5 + $0x13f0] sm:$0xff]
        %v890 = vld [vmem:[#allocation5 + $0x13f8] sm:$0xff]
        %v891 = vld [vmem:[#allocation5 + $0x1400] sm:$0xff]
        %v892 = vld [vmem:[#allocation5 + $0x1408] sm:$0xff]
        %v893 = vld [vmem:[#allocation5 + $0x1410] sm:$0xff]
        %v894 = vld [vmem:[#allocation5 + $0x1418] sm:$0xff]
        %v895 = vld [vmem:[#allocation5 + $0x1420] sm:$0xff]
        %v896 = vld [vmem:[#allocation5 + $0x1428] sm:$0xff]
        %v897 = vld [vmem:[#allocation5 + $0x1430] sm:$0xff]
        %v898 = vld [vmem:[#allocation5 + $0x1438] sm:$0xff]
        %v899 = vld [vmem:[#allocation5 + $0x1440] sm:$0xff]
        %v900 = vld [vmem:[#allocation5 + $0x1448] sm:$0xff]
        %v901 = vld [vmem:[#allocation5 + $0x1450] sm:$0xff]
        %v902 = vld [vmem:[#allocation5 + $0x1458] sm:$0xff]
        %v903 = vld [vmem:[#allocation5 + $0x1460] sm:$0xff]
        %v904 = vld [vmem:[#allocation5 + $0x1468] sm:$0xff]
        %v905 = vld [vmem:[#allocation5 + $0x1470] sm:$0xff]
        %v906 = vld [vmem:[#allocation5 + $0x1478] sm:$0xff]
        %v907 = vld [vmem:[#allocation5 + $0x1480] sm:$0xff]
        %v908 = vld [vmem:[#allocation5 + $0x1488] sm:$0xff]
        %v909 = vld [vmem:[#allocation5 + $0x1490] sm:$0xff]
        %v910 = vld [vmem:[#allocation5 + $0x1498] sm:$0xff]
        %v911 = vld [vmem:[#allocation5 + $0x14a0] sm:$0xff]
        %v912 = vld [vmem:[#allocation5 + $0x14a8] sm:$0xff]
        %v913 = vld [vmem:[#allocation5 + $0x14b0] sm:$0xff]
        %v914 = vld [vmem:[#allocation5 + $0x14b8] sm:$0xff]
        %v915 = vld [vmem:[#allocation5 + $0x14c0] sm:$0xff]
        %v916 = vld [vmem:[#allocation5 + $0x14c8] sm:$0xff]
        %v917 = vld [vmem:[#allocation5 + $0x14d0] sm:$0xff]
        %v918 = vld [vmem:[#allocation5 + $0x14d8] sm:$0xff]
        %v919 = vld [vmem:[#allocation5 + $0x14e0] sm:$0xff]
        %v920 = vld [vmem:[#allocation5 + $0x14e8] sm:$0xff]
        %v921 = vld [vmem:[#allocation5 + $0x14f0] sm:$0xff]
        %v922 = vld [vmem:[#allocation5 + $0x14f8] sm:$0xff]
        %v923 = vld [vmem:[#allocation5 + $0x1500] sm:$0xff]
        %v924 = vld [vmem:[#allocation5 + $0x1508] sm:$0xff]
        %v925 = vld [vmem:[#allocation5 + $0x1510] sm:$0xff]
        %v926 = vld [vmem:[#allocation5 + $0x1518] sm:$0xff]
        %v927 = vld [vmem:[#allocation5 + $0x1520] sm:$0xff]
        %v928 = vld [vmem:[#allocation5 + $0x1528] sm:$0xff]
        %v929 = vld [vmem:[#allocation5 + $0x1530] sm:$0xff]
        %v930 = vld [vmem:[#allocation5 + $0x1538] sm:$0xff]
        %v931 = vld [vmem:[#allocation5 + $0x1540] sm:$0xff]
        %v932 = vld [vmem:[#allocation5 + $0x1548] sm:$0xff]
        %v933 = vld [vmem:[#allocation5 + $0x1550] sm:$0xff]
        %v934 = vld [vmem:[#allocation5 + $0x1558] sm:$0xff]
        %v935 = vld [vmem:[#allocation5 + $0x1560] sm:$0xff]
        %v936 = vld [vmem:[#allocation5 + $0x1568] sm:$0xff]
        %v937 = vld [vmem:[#allocation5 + $0x1570] sm:$0xff]
        %v938 = vld [vmem:[#allocation5 + $0x1578] sm:$0xff]
        %v939 = vld [vmem:[#allocation5 + $0x1580] sm:$0xff]
        %v940 = vld [vmem:[#allocation5 + $0x1588] sm:$0xff]
        %v941 = vld [vmem:[#allocation5 + $0x1590] sm:$0xff]
        %v942 = vld [vmem:[#allocation5 + $0x1598] sm:$0xff]
        %v943 = vld [vmem:[#allocation5 + $0x15a0] sm:$0xff]
        %v944 = vld [vmem:[#allocation5 + $0x15a8] sm:$0xff]
        %v945 = vld [vmem:[#allocation5 + $0x15b0] sm:$0xff]
        %v946 = vld [vmem:[#allocation5 + $0x15b8] sm:$0xff]
        %v947 = vld [vmem:[#allocation5 + $0x15c0] sm:$0xff]
        %v948 = vld [vmem:[#allocation5 + $0x15c8] sm:$0xff]
        %v949 = vld [vmem:[#allocation5 + $0x15d0] sm:$0xff]
        %v950 = vld [vmem:[#allocation5 + $0x15d8] sm:$0xff]
        %v951 = vld [vmem:[#allocation5 + $0x15e0] sm:$0xff]
        %v952 = vld [vmem:[#allocation5 + $0x15e8] sm:$0xff]
        %v953 = vld [vmem:[#allocation5 + $0x15f0] sm:$0xff]
        %v954 = vld [vmem:[#allocation5 + $0x15f8] sm:$0xff]
        %v955 = vld [vmem:[#allocation5 + $0x1600] sm:$0xff]
        %v956 = vld [vmem:[#allocation5 + $0x1608] sm:$0xff]
        %v957 = vld [vmem:[#allocation5 + $0x1610] sm:$0xff]
        %v958 = vld [vmem:[#allocation5 + $0x1618] sm:$0xff]
        %v959 = vld [vmem:[#allocation5 + $0x1620] sm:$0xff]
        %v960 = vld [vmem:[#allocation5 + $0x1628] sm:$0xff]
        %v961 = vld [vmem:[#allocation5 + $0x1630] sm:$0xff]
        %v962 = vld [vmem:[#allocation5 + $0x1638] sm:$0xff]
        %v963 = vld [vmem:[#allocation5 + $0x1640] sm:$0xff]
        %v964 = vld [vmem:[#allocation5 + $0x1648] sm:$0xff]
        %v965 = vld [vmem:[#allocation5 + $0x1650] sm:$0xff]
        %v966 = vld [vmem:[#allocation5 + $0x1658] sm:$0xff]
        %v967 = vld [vmem:[#allocation5 + $0x1660] sm:$0xff]
        %v968 = vld [vmem:[#allocation5 + $0x1668] sm:$0xff]
        %v969 = vld [vmem:[#allocation5 + $0x1670] sm:$0xff]
        %v970 = vld [vmem:[#allocation5 + $0x1678] sm:$0xff]
        %v971 = vld [vmem:[#allocation5 + $0x1680] sm:$0xff]
        %v972 = vld [vmem:[#allocation5 + $0x1688] sm:$0xff]
        %v973 = vld [vmem:[#allocation5 + $0x1690] sm:$0xff]
        %v974 = vld [vmem:[#allocation5 + $0x1698] sm:$0xff]
        %v975 = vld [vmem:[#allocation5 + $0x16a0] sm:$0xff]
        %v976 = vld [vmem:[#allocation5 + $0x16a8] sm:$0xff]
        %v977 = vld [vmem:[#allocation5 + $0x16b0] sm:$0xff]
        %v978 = vld [vmem:[#allocation5 + $0x16b8] sm:$0xff]
        %v979 = vld [vmem:[#allocation5 + $0x16c0] sm:$0xff]
        %v980 = vld [vmem:[#allocation5 + $0x16c8] sm:$0xff]
        %v981 = vld [vmem:[#allocation5 + $0x16d0] sm:$0xff]
        %v982 = vld [vmem:[#allocation5 + $0x16d8] sm:$0xff]
        %v983 = vld [vmem:[#allocation5 + $0x16e0] sm:$0xff]
        %v984 = vld [vmem:[#allocation5 + $0x16e8] sm:$0xff]
        %v985 = vld [vmem:[#allocation5 + $0x16f0] sm:$0xff]
        %v986 = vld [vmem:[#allocation5 + $0x16f8] sm:$0xff]
        %v987 = vld [vmem:[#allocation5 + $0x1700] sm:$0xff]
        %v988 = vld [vmem:[#allocation5 + $0x1708] sm:$0xff]
        %v989 = vld [vmem:[#allocation5 + $0x1710] sm:$0xff]
        %v990 = vld [vmem:[#allocation5 + $0x1718] sm:$0xff]
        %v991 = vld [vmem:[#allocation5 + $0x1720] sm:$0xff]
        %v992 = vld [vmem:[#allocation5 + $0x1728] sm:$0xff]
        %v993 = vld [vmem:[#allocation5 + $0x1730] sm:$0xff]
        %v994 = vld [vmem:[#allocation5 + $0x1738] sm:$0xff]
        %v995 = vld [vmem:[#allocation5 + $0x1740] sm:$0xff]
        %v996 = vld [vmem:[#allocation5 + $0x1748] sm:$0xff]
        %v997 = vld [vmem:[#allocation5 + $0x1750] sm:$0xff]
        %v998 = vld [vmem:[#allocation5 + $0x1758] sm:$0xff]
        %v999 = vld [vmem:[#allocation5 + $0x1760] sm:$0xff]
        %v1000 = vld [vmem:[#allocation5 + $0x1768] sm:$0xff]
        %v1001 = vld [vmem:[#allocation5 + $0x1770] sm:$0xff]
        %v1002 = vld [vmem:[#allocation5 + $0x1778] sm:$0xff]
        %v1003 = vld [vmem:[#allocation5 + $0x1780] sm:$0xff]
        %v1004 = vld [vmem:[#allocation5 + $0x1788] sm:$0xff]
        %v1005 = vld [vmem:[#allocation5 + $0x1790] sm:$0xff]
        %v1006 = vld [vmem:[#allocation5 + $0x1798] sm:$0xff]
        %v1007 = vld [vmem:[#allocation5 + $0x17a0] sm:$0xff]
        %v1008 = vld [vmem:[#allocation5 + $0x17a8] sm:$0xff]
        %v1009 = vld [vmem:[#allocation5 + $0x17b0] sm:$0xff]
        %v1010 = vld [vmem:[#allocation5 + $0x17b8] sm:$0xff]
        %v1011 = vld [vmem:[#allocation5 + $0x17c0] sm:$0xff]
        %v1012 = vld [vmem:[#allocation5 + $0x17c8] sm:$0xff]
        %v1013 = vld [vmem:[#allocation5 + $0x17d0] sm:$0xff]
        %v1014 = vld [vmem:[#allocation5 + $0x17d8] sm:$0xff]
        %v1015 = vld [vmem:[#allocation5 + $0x17e0] sm:$0xff]
        %v1016 = vld [vmem:[#allocation5 + $0x17e8] sm:$0xff]
        %v1017 = vld [vmem:[#allocation5 + $0x17f0] sm:$0xff]
        %v1018 = vld [vmem:[#allocation5 + $0x17f8] sm:$0xff]
        %1019 = vmatprep.subr.mxu0 %v252
        %1020 = vmatpush1.msra.mxu0 %v251
        %1021 = vmatprep.subr.mxu0 %v264
        %1022 = vmatpush1.msra.mxu0 %v263
        %1023 = vmatprep.subr.mxu0 %v276
        %1024 = vmatpush1.msra.mxu0 %v275
        %1025 = vmatprep.subr.mxu0 %v288
        %1026 = vmatpush1.msra.mxu0 %v287
        %1027 = vmatprep.subr.mxu0 %v300
        %1028 = vmatpush1.msra.mxu0 %v299
        %1029 = vmatprep.subr.mxu0 %v312
        %1030 = vmatpush1.msra.mxu0 %v311
        %1031 = vmatprep.subr.mxu0 %v324
        %1032 = vmatpush1.msra.mxu0 %v323
        %1033 = vmatprep.subr.mxu0 %v336
        %1034 = vmatpush1.msra.mxu0 %v335
        %1035 = vmatprep.subr.mxu0 %v348
        %1036 = vmatpush1.msra.mxu0 %v347
        %1037 = vmatprep.subr.mxu0 %v360
        %1038 = vmatpush1.msra.mxu0 %v359
        %1039 = vmatprep.subr.mxu0 %v372
        %1040 = vmatpush1.msra.mxu0 %v371
        %1041 = vmatprep.subr.mxu0 %v384
        %1042 = vmatpush1.msra.mxu0 %v383
        %1043 = vmatprep.subr.mxu0 %v396
        %1044 = vmatpush1.msra.mxu0 %v395
        %1045 = vmatprep.subr.mxu0 %v408
        %1046 = vmatpush1.msra.mxu0 %v407
        %1047 = vmatprep.subr.mxu0 %v420
        %1048 = vmatpush1.msra.mxu0 %v419
        %1049 = vmatprep.subr.mxu0 %v432
        %1050 = vmatpush1.msra.mxu0 %v431
        %1051 = vmatprep.subr.mxu0 %v444
        %1052 = vmatpush1.msra.mxu0 %v443
        %1053 = vmatprep.subr.mxu0 %v456
        %1054 = vmatpush1.msra.mxu0 %v455
        %1055 = vmatprep.subr.mxu0 %v468
        %1056 = vmatpush1.msra.mxu0 %v467
        %1057 = vmatprep.subr.mxu0 %v480
        %1058 = vmatpush1.msra.mxu0 %v479
        %1059 = vmatprep.subr.mxu0 %v492
        %1060 = vmatpush1.msra.mxu0 %v491
        %1061 = vmatprep.subr.mxu0 %v504
        %1062 = vmatpush1.msra.mxu0 %v503
        %1063 = vmatprep.subr.mxu0 %v516
        %1064 = vmatpush1.msra.mxu0 %v515
        %1065 = vmatprep.subr.mxu0 %v528
        %1066 = vmatpush1.msra.mxu0 %v527
        %1067 = vmatprep.subr.mxu0 %v540
        %1068 = vmatpush1.msra.mxu0 %v539
        %1069 = vmatprep.subr.mxu0 %v552
        %1070 = vmatpush1.msra.mxu0 %v551
        %1071 = vmatprep.subr.mxu0 %v564
        %1072 = vmatpush1.msra.mxu0 %v563
        %1073 = vmatprep.subr.mxu0 %v576
        %1074 = vmatpush1.msra.mxu0 %v575
        %1075 = vmatprep.subr.mxu0 %v588
        %1076 = vmatpush1.msra.mxu0 %v587
        %1077 = vmatprep.subr.mxu0 %v600
        %1078 = vmatpush1.msra.mxu0 %v599
        %1079 = vmatprep.subr.mxu0 %v612
        %1080 = vmatpush1.msra.mxu0 %v611
        %1081 = vmatprep.subr.mxu0 %v624
        %1082 = vmatpush1.msra.mxu0 %v623
        %1083 = vmatprep.mubr.f32.mxu0 %v248
        %1084 = vmatmul.mubr.f32.gmra.mrb[0].mxu0 %v247
        %v1085 = vpop.f32.mrb[0].mxu0
        %v1086 = vadd.f32 0.0, %v1085
        %v1087 = vpop.f32.mrb[0].mxu0
        %v1088 = vadd.f32 0.0, %v1087
        %1089 = vdwg.mxu0
        %1090 = vmatprep.subr.mxu0 %v636
        %1091 = vmatpush1.msra.mxu0 %v635
        %1092 = vmatprep.subr.mxu0 %v648
        %1093 = vmatpush1.msra.mxu0 %v647
        %1094 = vmatprep.subr.mxu0 %v660
        %1095 = vmatpush1.msra.mxu0 %v659
        %1096 = vmatprep.subr.mxu0 %v672
        %1097 = vmatpush1.msra.mxu0 %v671
        %1098 = vmatprep.subr.mxu0 %v684
        %1099 = vmatpush1.msra.mxu0 %v683
        %1100 = vmatprep.subr.mxu0 %v696
        %1101 = vmatpush1.msra.mxu0 %v695
        %1102 = vmatprep.subr.mxu0 %v708
        %1103 = vmatpush1.msra.mxu0 %v707
        %1104 = vmatprep.subr.mxu0 %v720
        %1105 = vmatpush1.msra.mxu0 %v719
        %1106 = vmatprep.subr.mxu0 %v732
        %1107 = vmatpush1.msra.mxu0 %v731
        %1108 = vmatprep.subr.mxu0 %v744
        %1109 = vmatpush1.msra.mxu0 %v743
        %1110 = vmatprep.subr.mxu0 %v756
        %1111 = vmatpush1.msra.mxu0 %v755
        %1112 = vmatprep.subr.mxu0 %v768
        %1113 = vmatpush1.msra.mxu0 %v767
        %1114 = vmatprep.subr.mxu0 %v780
        %1115 = vmatpush1.msra.mxu0 %v779
        %1116 = vmatprep.subr.mxu0 %v792
        %1117 = vmatpush1.msra.mxu0 %v791
        %1118 = vmatprep.subr.mxu0 %v804
        %1119 = vmatpush1.msra.mxu0 %v803
        %1120 = vmatprep.subr.mxu0 %v816
        %1121 = vmatpush1.msra.mxu0 %v815
        %1122 = vmatprep.subr.mxu0 %v828
        %1123 = vmatpush1.msra.mxu0 %v827
        %1124 = vmatprep.subr.mxu0 %v840
        %1125 = vmatpush1.msra.mxu0 %v839
        %1126 = vmatprep.subr.mxu0 %v852
        %1127 = vmatpush1.msra.mxu0 %v851
        %1128 = vmatprep.subr.mxu0 %v864
        %1129 = vmatpush1.msra.mxu0 %v863
        %1130 = vmatprep.subr.mxu0 %v876
        %1131 = vmatpush1.msra.mxu0 %v875
        %1132 = vmatprep.subr.mxu0 %v888
        %1133 = vmatpush1.msra.mxu0 %v887
        %1134 = vmatprep.subr.mxu0 %v900
        %1135 = vmatpush1.msra.mxu0 %v899
        %1136 = vmatprep.subr.mxu0 %v912
        %1137 = vmatpush1.msra.mxu0 %v911
        %1138 = vmatprep.subr.mxu0 %v924
        %1139 = vmatpush1.msra.mxu0 %v923
        %1140 = vmatprep.subr.mxu0 %v936
        %1141 = vmatpush1.msra.mxu0 %v935
        %1142 = vmatprep.subr.mxu0 %v948
        %1143 = vmatpush1.msra.mxu0 %v947
        %1144 = vmatprep.subr.mxu0 %v960
        %1145 = vmatpush1.msra.mxu0 %v959
        %1146 = vmatprep.subr.mxu0 %v972
        %1147 = vmatpush1.msra.mxu0 %v971
        %1148 = vmatprep.subr.mxu0 %v984
        %1149 = vmatpush1.msra.mxu0 %v983
        %1150 = vmatprep.subr.mxu0 %v996
        %1151 = vmatpush1.msra.mxu0 %v995
        %1152 = vmatprep.subr.mxu0 %v1008
        %1153 = vmatpush1.msra.mxu0 %v1007
        %1154 = vmatprep.mubr.f32.mxu0 %v250
        %1155 = vmatmul.mubr.f32.gmra.mrb[0].mxu0 %v249
        %v1156 = vpop.f32.mrb[0].mxu0
        %v1157 = vadd.f32 %v1086, %v1156
        %v1158 = vpop.f32.mrb[0].mxu0
        %v1159 = vadd.f32 %v1088, %v1158
        %1160 = vdwg.mxu0
        %1161 = vmatprep.subr.mxu0 %v254
        %1162 = vmatpush1.msra.mxu0 %v253
        %1163 = vmatprep.subr.mxu0 %v266
        %1164 = vmatpush1.msra.mxu0 %v265
        %1165 = vmatprep.subr.mxu0 %v278
        %1166 = vmatpush1.msra.mxu0 %v277
        %1167 = vmatprep.subr.mxu0 %v290
        %1168 = vmatpush1.msra.mxu0 %v289
        %1169 = vmatprep.subr.mxu0 %v302
        %1170 = vmatpush1.msra.mxu0 %v301
        %1171 = vmatprep.subr.mxu0 %v314
        %1172 = vmatpush1.msra.mxu0 %v313
        %1173 = vmatprep.subr.mxu0 %v326
        %1174 = vmatpush1.msra.mxu0 %v325
        %1175 = vmatprep.subr.mxu0 %v338
        %1176 = vmatpush1.msra.mxu0 %v337
        %1177 = vmatprep.subr.mxu0 %v350
        %1178 = vmatpush1.msra.mxu0 %v349
        %1179 = vmatprep.subr.mxu0 %v362
        %1180 = vmatpush1.msra.mxu0 %v361
        %1181 = vmatprep.subr.mxu0 %v374
        %1182 = vmatpush1.msra.mxu0 %v373
        %1183 = vmatprep.subr.mxu0 %v386
        %1184 = vmatpush1.msra.mxu0 %v385
        %1185 = vmatprep.subr.mxu0 %v398
        %1186 = vmatpush1.msra.mxu0 %v397
        %1187 = vmatprep.subr.mxu0 %v410
        %1188 = vmatpush1.msra.mxu0 %v409
        %1189 = vmatprep.subr.mxu0 %v422
        %1190 = vmatpush1.msra.mxu0 %v421
        %1191 = vmatprep.subr.mxu0 %v434
        %1192 = vmatpush1.msra.mxu0 %v433
        %1193 = vmatprep.subr.mxu0 %v446
        %1194 = vmatpush1.msra.mxu0 %v445
        %1195 = vmatprep.subr.mxu0 %v458
        %1196 = vmatpush1.msra.mxu0 %v457
        %1197 = vmatprep.subr.mxu0 %v470
        %1198 = vmatpush1.msra.mxu0 %v469
        %1199 = vmatprep.subr.mxu0 %v482
        %1200 = vmatpush1.msra.mxu0 %v481
        %1201 = vmatprep.subr.mxu0 %v494
        %1202 = vmatpush1.msra.mxu0 %v493
        %1203 = vmatprep.subr.mxu0 %v506
        %1204 = vmatpush1.msra.mxu0 %v505
        %1205 = vmatprep.subr.mxu0 %v518
        %1206 = vmatpush1.msra.mxu0 %v517
        %1207 = vmatprep.subr.mxu0 %v530
        %1208 = vmatpush1.msra.mxu0 %v529
        %1209 = vmatprep.subr.mxu0 %v542
        %1210 = vmatpush1.msra.mxu0 %v541
        %1211 = vmatprep.subr.mxu0 %v554
        %1212 = vmatpush1.msra.mxu0 %v553
        %1213 = vmatprep.subr.mxu0 %v566
        %1214 = vmatpush1.msra.mxu0 %v565
        %1215 = vmatprep.subr.mxu0 %v578
        %1216 = vmatpush1.msra.mxu0 %v577
        %1217 = vmatprep.subr.mxu0 %v590
        %1218 = vmatpush1.msra.mxu0 %v589
        %1219 = vmatprep.subr.mxu0 %v602
        %1220 = vmatpush1.msra.mxu0 %v601
        %1221 = vmatprep.subr.mxu0 %v614
        %1222 = vmatpush1.msra.mxu0 %v613
        %1223 = vmatprep.subr.mxu0 %v626
        %1224 = vmatpush1.msra.mxu0 %v625
        %1225 = vmatprep.mubr.f32.mxu0 %v248
        %1226 = vmatmul.mubr.f32.gmra.mrb[0].mxu0 %v247
        %v1227 = vpop.f32.mrb[0].mxu0
        %v1228 = vadd.f32 0.0, %v1227
        %v1229 = vpop.f32.mrb[0].mxu0
        %v1230 = vadd.f32 0.0, %v1229
        %1231 = vdwg.mxu0
        %1232 = vmatprep.subr.mxu0 %v638
        %1233 = vmatpush1.msra.mxu0 %v637
        %1234 = vmatprep.subr.mxu0 %v650
        %1235 = vmatpush1.msra.mxu0 %v649
        %1236 = vmatprep.subr.mxu0 %v662
        %1237 = vmatpush1.msra.mxu0 %v661
        %1238 = vmatprep.subr.mxu0 %v674
        %1239 = vmatpush1.msra.mxu0 %v673
        %1240 = vmatprep.subr.mxu0 %v686
        %1241 = vmatpush1.msra.mxu0 %v685
        %1242 = vmatprep.subr.mxu0 %v698
        %1243 = vmatpush1.msra.mxu0 %v697
        %1244 = vmatprep.subr.mxu0 %v710
        %1245 = vmatpush1.msra.mxu0 %v709
        %1246 = vmatprep.subr.mxu0 %v722
        %1247 = vmatpush1.msra.mxu0 %v721
        %1248 = vmatprep.subr.mxu0 %v734
        %1249 = vmatpush1.msra.mxu0 %v733
        %1250 = vmatprep.subr.mxu0 %v746
        %1251 = vmatpush1.msra.mxu0 %v745
        %1252 = vmatprep.subr.mxu0 %v758
        %1253 = vmatpush1.msra.mxu0 %v757
        %1254 = vmatprep.subr.mxu0 %v770
        %1255 = vmatpush1.msra.mxu0 %v769
        %1256 = vmatprep.subr.mxu0 %v782
        %1257 = vmatpush1.msra.mxu0 %v781
        %1258 = vmatprep.subr.mxu0 %v794
        %1259 = vmatpush1.msra.mxu0 %v793
        %1260 = vmatprep.subr.mxu0 %v806
        %1261 = vmatpush1.msra.mxu0 %v805
        %1262 = vmatprep.subr.mxu0 %v818
        %1263 = vmatpush1.msra.mxu0 %v817
        %1264 = vmatprep.subr.mxu0 %v830
        %1265 = vmatpush1.msra.mxu0 %v829
        %1266 = vmatprep.subr.mxu0 %v842
        %1267 = vmatpush1.msra.mxu0 %v841
        %1268 = vmatprep.subr.mxu0 %v854
        %1269 = vmatpush1.msra.mxu0 %v853
        %1270 = vmatprep.subr.mxu0 %v866
        %1271 = vmatpush1.msra.mxu0 %v865
        %1272 = vmatprep.subr.mxu0 %v878
        %1273 = vmatpush1.msra.mxu0 %v877
        %1274 = vmatprep.subr.mxu0 %v890
        %1275 = vmatpush1.msra.mxu0 %v889
        %1276 = vmatprep.subr.mxu0 %v902
        %1277 = vmatpush1.msra.mxu0 %v901
        %1278 = vmatprep.subr.mxu0 %v914
        %1279 = vmatpush1.msra.mxu0 %v913
        %1280 = vmatprep.subr.mxu0 %v926
        %1281 = vmatpush1.msra.mxu0 %v925
        %1282 = vmatprep.subr.mxu0 %v938
        %1283 = vmatpush1.msra.mxu0 %v937
        %1284 = vmatprep.subr.mxu0 %v950
        %1285 = vmatpush1.msra.mxu0 %v949
        %1286 = vmatprep.subr.mxu0 %v962
        %1287 = vmatpush1.msra.mxu0 %v961
        %1288 = vmatprep.subr.mxu0 %v974
        %1289 = vmatpush1.msra.mxu0 %v973
        %1290 = vmatprep.subr.mxu0 %v986
        %1291 = vmatpush1.msra.mxu0 %v985
        %1292 = vmatprep.subr.mxu0 %v998
        %1293 = vmatpush1.msra.mxu0 %v997
        %1294 = vmatprep.subr.mxu0 %v1010
        %1295 = vmatpush1.msra.mxu0 %v1009
        %1296 = vmatprep.mubr.f32.mxu0 %v250
        %1297 = vmatmul.mubr.f32.gmra.mrb[0].mxu0 %v249
        %v1298 = vpop.f32.mrb[0].mxu0
        %v1299 = vadd.f32 %v1228, %v1298
        %v1300 = vpop.f32.mrb[0].mxu0
        %v1301 = vadd.f32 %v1230, %v1300
        %1302 = vdwg.mxu0
        %1303 = vmatprep.subr.mxu0 %v256
        %1304 = vmatpush1.msra.mxu0 %v255
        %1305 = vmatprep.subr.mxu0 %v268
        %1306 = vmatpush1.msra.mxu0 %v267
        %1307 = vmatprep.subr.mxu0 %v280
        %1308 = vmatpush1.msra.mxu0 %v279
        %1309 = vmatprep.subr.mxu0 %v292
        %1310 = vmatpush1.msra.mxu0 %v291
        %1311 = vmatprep.subr.mxu0 %v304
        %1312 = vmatpush1.msra.mxu0 %v303
        %1313 = vmatprep.subr.mxu0 %v316
        %1314 = vmatpush1.msra.mxu0 %v315
        %1315 = vmatprep.subr.mxu0 %v328
        %1316 = vmatpush1.msra.mxu0 %v327
        %1317 = vmatprep.subr.mxu0 %v340
        %1318 = vmatpush1.msra.mxu0 %v339
        %1319 = vmatprep.subr.mxu0 %v352
        %1320 = vmatpush1.msra.mxu0 %v351
        %1321 = vmatprep.subr.mxu0 %v364
        %1322 = vmatpush1.msra.mxu0 %v363
        %1323 = vmatprep.subr.mxu0 %v376
        %1324 = vmatpush1.msra.mxu0 %v375
        %1325 = vmatprep.subr.mxu0 %v388
        %1326 = vmatpush1.msra.mxu0 %v387
        %1327 = vmatprep.subr.mxu0 %v400
        %1328 = vmatpush1.msra.mxu0 %v399
        %1329 = vmatprep.subr.mxu0 %v412
        %1330 = vmatpush1.msra.mxu0 %v411
        %1331 = vmatprep.subr.mxu0 %v424
        %1332 = vmatpush1.msra.mxu0 %v423
        %1333 = vmatprep.subr.mxu0 %v436
        %1334 = vmatpush1.msra.mxu0 %v435
        %1335 = vmatprep.subr.mxu0 %v448
        %1336 = vmatpush1.msra.mxu0 %v447
        %1337 = vmatprep.subr.mxu0 %v460
        %1338 = vmatpush1.msra.mxu0 %v459
        %1339 = vmatprep.subr.mxu0 %v472
        %1340 = vmatpush1.msra.mxu0 %v471
        %1341 = vmatprep.subr.mxu0 %v484
        %1342 = vmatpush1.msra.mxu0 %v483
        %1343 = vmatprep.subr.mxu0 %v496
        %1344 = vmatpush1.msra.mxu0 %v495
        %1345 = vmatprep.subr.mxu0 %v508
        %1346 = vmatpush1.msra.mxu0 %v507
        %1347 = vmatprep.subr.mxu0 %v520
        %1348 = vmatpush1.msra.mxu0 %v519
        %1349 = vmatprep.subr.mxu0 %v532
        %1350 = vmatpush1.msra.mxu0 %v531
        %1351 = vmatprep.subr.mxu0 %v544
        %1352 = vmatpush1.msra.mxu0 %v543
        %1353 = vmatprep.subr.mxu0 %v556
        %1354 = vmatpush1.msra.mxu0 %v555
        %1355 = vmatprep.subr.mxu0 %v568
        %1356 = vmatpush1.msra.mxu0 %v567
        %1357 = vmatprep.subr.mxu0 %v580
        %1358 = vmatpush1.msra.mxu0 %v579
        %1359 = vmatprep.subr.mxu0 %v592
        %1360 = vmatpush1.msra.mxu0 %v591
        %1361 = vmatprep.subr.mxu0 %v604
        %1362 = vmatpush1.msra.mxu0 %v603
        %1363 = vmatprep.subr.mxu0 %v616
        %1364 = vmatpush1.msra.mxu0 %v615
        %1365 = vmatprep.subr.mxu0 %v628
        %1366 = vmatpush1.msra.mxu0 %v627
        %1367 = vmatprep.mubr.f32.mxu0 %v248
        %1368 = vmatmul.mubr.f32.gmra.mrb[0].mxu0 %v247
        %v1369 = vpop.f32.mrb[0].mxu0
        %v1370 = vadd.f32 0.0, %v1369
        %v1371 = vpop.f32.mrb[0].mxu0
        %v1372 = vadd.f32 0.0, %v1371
        %1373 = vdwg.mxu0
        %1374 = vmatprep.subr.mxu0 %v640
        %1375 = vmatpush1.msra.mxu0 %v639
        %1376 = vmatprep.subr.mxu0 %v652
        %1377 = vmatpush1.msra.mxu0 %v651
        %1378 = vmatprep.subr.mxu0 %v664
        %1379 = vmatpush1.msra.mxu0 %v663
        %1380 = vmatprep.subr.mxu0 %v676
        %1381 = vmatpush1.msra.mxu0 %v675
        %1382 = vmatprep.subr.mxu0 %v688
        %1383 = vmatpush1.msra.mxu0 %v687
        %1384 = vmatprep.subr.mxu0 %v700
        %1385 = vmatpush1.msra.mxu0 %v699
        %1386 = vmatprep.subr.mxu0 %v712
        %1387 = vmatpush1.msra.mxu0 %v711
        %1388 = vmatprep.subr.mxu0 %v724
        %1389 = vmatpush1.msra.mxu0 %v723
        %1390 = vmatprep.subr.mxu0 %v736
        %1391 = vmatpush1.msra.mxu0 %v735
        %1392 = vmatprep.subr.mxu0 %v748
        %1393 = vmatpush1.msra.mxu0 %v747
        %1394 = vmatprep.subr.mxu0 %v760
        %1395 = vmatpush1.msra.mxu0 %v759
        %1396 = vmatprep.subr.mxu0 %v772
        %1397 = vmatpush1.msra.mxu0 %v771
        %1398 = vmatprep.subr.mxu0 %v784
        %1399 = vmatpush1.msra.mxu0 %v783
        %1400 = vmatprep.subr.mxu0 %v796
        %1401 = vmatpush1.msra.mxu0 %v795
        %1402 = vmatprep.subr.mxu0 %v808
        %1403 = vmatpush1.msra.mxu0 %v807
        %1404 = vmatprep.subr.mxu0 %v820
        %1405 = vmatpush1.msra.mxu0 %v819
        %1406 = vmatprep.subr.mxu0 %v832
        %1407 = vmatpush1.msra.mxu0 %v831
        %1408 = vmatprep.subr.mxu0 %v844
        %1409 = vmatpush1.msra.mxu0 %v843
        %1410 = vmatprep.subr.mxu0 %v856
        %1411 = vmatpush1.msra.mxu0 %v855
        %1412 = vmatprep.subr.mxu0 %v868
        %1413 = vmatpush1.msra.mxu0 %v867
        %1414 = vmatprep.subr.mxu0 %v880
        %1415 = vmatpush1.msra.mxu0 %v879
        %1416 = vmatprep.subr.mxu0 %v892
        %1417 = vmatpush1.msra.mxu0 %v891
        %1418 = vmatprep.subr.mxu0 %v904
        %1419 = vmatpush1.msra.mxu0 %v903
        %1420 = vmatprep.subr.mxu0 %v916
        %1421 = vmatpush1.msra.mxu0 %v915
        %1422 = vmatprep.subr.mxu0 %v928
        %1423 = vmatpush1.msra.mxu0 %v927
        %1424 = vmatprep.subr.mxu0 %v940
        %1425 = vmatpush1.msra.mxu0 %v939
        %1426 = vmatprep.subr.mxu0 %v952
        %1427 = vmatpush1.msra.mxu0 %v951
        %1428 = vmatprep.subr.mxu0 %v964
        %1429 = vmatpush1.msra.mxu0 %v963
        %1430 = vmatprep.subr.mxu0 %v976
        %1431 = vmatpush1.msra.mxu0 %v975
        %1432 = vmatprep.subr.mxu0 %v988
        %1433 = vmatpush1.msra.mxu0 %v987
        %1434 = vmatprep.subr.mxu0 %v1000
        %1435 = vmatpush1.msra.mxu0 %v999
        %1436 = vmatprep.subr.mxu0 %v1012
        %1437 = vmatpush1.msra.mxu0 %v1011
        %1438 = vmatprep.mubr.f32.mxu0 %v250
        %1439 = vmatmul.mubr.f32.gmra.mrb[0].mxu0 %v249
        %v1440 = vpop.f32.mrb[0].mxu0
        %v1441 = vadd.f32 %v1370, %v1440
        %v1442 = vpop.f32.mrb[0].mxu0
        %v1443 = vadd.f32 %v1372, %v1442
        %1444 = vdwg.mxu0
        %1445 = vmatprep.subr.mxu0 %v258
        %1446 = vmatpush1.msra.mxu0 %v257
        %1447 = vmatprep.subr.mxu0 %v270
        %1448 = vmatpush1.msra.mxu0 %v269
        %1449 = vmatprep.subr.mxu0 %v282
        %1450 = vmatpush1.msra.mxu0 %v281
        %1451 = vmatprep.subr.mxu0 %v294
        %1452 = vmatpush1.msra.mxu0 %v293
        %1453 = vmatprep.subr.mxu0 %v306
        %1454 = vmatpush1.msra.mxu0 %v305
        %1455 = vmatprep.subr.mxu0 %v318
        %1456 = vmatpush1.msra.mxu0 %v317
        %1457 = vmatprep.subr.mxu0 %v330
        %1458 = vmatpush1.msra.mxu0 %v329
        %1459 = vmatprep.subr.mxu0 %v342
        %1460 = vmatpush1.msra.mxu0 %v341
        %1461 = vmatprep.subr.mxu0 %v354
        %1462 = vmatpush1.msra.mxu0 %v353
        %1463 = vmatprep.subr.mxu0 %v366
        %1464 = vmatpush1.msra.mxu0 %v365
        %1465 = vmatprep.subr.mxu0 %v378
        %1466 = vmatpush1.msra.mxu0 %v377
        %1467 = vmatprep.subr.mxu0 %v390
        %1468 = vmatpush1.msra.mxu0 %v389
        %1469 = vmatprep.subr.mxu0 %v402
        %1470 = vmatpush1.msra.mxu0 %v401
        %1471 = vmatprep.subr.mxu0 %v414
        %1472 = vmatpush1.msra.mxu0 %v413
        %1473 = vmatprep.subr.mxu0 %v426
        %1474 = vmatpush1.msra.mxu0 %v425
        %1475 = vmatprep.subr.mxu0 %v438
        %1476 = vmatpush1.msra.mxu0 %v437
        %1477 = vmatprep.subr.mxu0 %v450
        %1478 = vmatpush1.msra.mxu0 %v449
        %1479 = vmatprep.subr.mxu0 %v462
        %1480 = vmatpush1.msra.mxu0 %v461
        %1481 = vmatprep.subr.mxu0 %v474
        %1482 = vmatpush1.msra.mxu0 %v473
        %1483 = vmatprep.subr.mxu0 %v486
        %1484 = vmatpush1.msra.mxu0 %v485
        %1485 = vmatprep.subr.mxu0 %v498
        %1486 = vmatpush1.msra.mxu0 %v497
        %1487 = vmatprep.subr.mxu0 %v510
        %1488 = vmatpush1.msra.mxu0 %v509
        %1489 = vmatprep.subr.mxu0 %v522
        %1490 = vmatpush1.msra.mxu0 %v521
        %1491 = vmatprep.subr.mxu0 %v534
        %1492 = vmatpush1.msra.mxu0 %v533
        %1493 = vmatprep.subr.mxu0 %v546
        %1494 = vmatpush1.msra.mxu0 %v545
        %1495 = vmatprep.subr.mxu0 %v558
        %1496 = vmatpush1.msra.mxu0 %v557
        %1497 = vmatprep.subr.mxu0 %v570
        %1498 = vmatpush1.msra.mxu0 %v569
        %1499 = vmatprep.subr.mxu0 %v582
        %1500 = vmatpush1.msra.mxu0 %v581
        %1501 = vmatprep.subr.mxu0 %v594
        %1502 = vmatpush1.msra.mxu0 %v593
        %1503 = vmatprep.subr.mxu0 %v606
        %1504 = vmatpush1.msra.mxu0 %v605
        %1505 = vmatprep.subr.mxu0 %v618
        %1506 = vmatpush1.msra.mxu0 %v617
        %1507 = vmatprep.subr.mxu0 %v630
        %1508 = vmatpush1.msra.mxu0 %v629
        %1509 = vmatprep.mubr.f32.mxu0 %v248
        %1510 = vmatmul.mubr.f32.gmra.mrb[0].mxu0 %v247
        %v1511 = vpop.f32.mrb[0].mxu0
        %v1512 = vadd.f32 0.0, %v1511
        %v1513 = vpop.f32.mrb[0].mxu0
        %v1514 = vadd.f32 0.0, %v1513
        %1515 = vdwg.mxu0
        %1516 = vmatprep.subr.mxu0 %v642
        %1517 = vmatpush1.msra.mxu0 %v641
        %1518 = vmatprep.subr.mxu0 %v654
        %1519 = vmatpush1.msra.mxu0 %v653
        %1520 = vmatprep.subr.mxu0 %v666
        %1521 = vmatpush1.msra.mxu0 %v665
        %1522 = vmatprep.subr.mxu0 %v678
        %1523 = vmatpush1.msra.mxu0 %v677
        %1524 = vmatprep.subr.mxu0 %v690
        %1525 = vmatpush1.msra.mxu0 %v689
        %1526 = vmatprep.subr.mxu0 %v702
        %1527 = vmatpush1.msra.mxu0 %v701
        %1528 = vmatprep.subr.mxu0 %v714
        %1529 = vmatpush1.msra.mxu0 %v713
        %1530 = vmatprep.subr.mxu0 %v726
        %1531 = vmatpush1.msra.mxu0 %v725
        %1532 = vmatprep.subr.mxu0 %v738
        %1533 = vmatpush1.msra.mxu0 %v737
        %1534 = vmatprep.subr.mxu0 %v750
        %1535 = vmatpush1.msra.mxu0 %v749
        %1536 = vmatprep.subr.mxu0 %v762
        %1537 = vmatpush1.msra.mxu0 %v761
        %1538 = vmatprep.subr.mxu0 %v774
        %1539 = vmatpush1.msra.mxu0 %v773
        %1540 = vmatprep.subr.mxu0 %v786
        %1541 = vmatpush1.msra.mxu0 %v785
        %1542 = vmatprep.subr.mxu0 %v798
        %1543 = vmatpush1.msra.mxu0 %v797
        %1544 = vmatprep.subr.mxu0 %v810
        %1545 = vmatpush1.msra.mxu0 %v809
        %1546 = vmatprep.subr.mxu0 %v822
        %1547 = vmatpush1.msra.mxu0 %v821
        %1548 = vmatprep.subr.mxu0 %v834
        %1549 = vmatpush1.msra.mxu0 %v833
        %1550 = vmatprep.subr.mxu0 %v846
        %1551 = vmatpush1.msra.mxu0 %v845
        %1552 = vmatprep.subr.mxu0 %v858
        %1553 = vmatpush1.msra.mxu0 %v857
        %1554 = vmatprep.subr.mxu0 %v870
        %1555 = vmatpush1.msra.mxu0 %v869
        %1556 = vmatprep.subr.mxu0 %v882
        %1557 = vmatpush1.msra.mxu0 %v881
        %1558 = vmatprep.subr.mxu0 %v894
        %1559 = vmatpush1.msra.mxu0 %v893
        %1560 = vmatprep.subr.mxu0 %v906
        %1561 = vmatpush1.msra.mxu0 %v905
        %1562 = vmatprep.subr.mxu0 %v918
        %1563 = vmatpush1.msra.mxu0 %v917
        %1564 = vmatprep.subr.mxu0 %v930
        %1565 = vmatpush1.msra.mxu0 %v929
        %1566 = vmatprep.subr.mxu0 %v942
        %1567 = vmatpush1.msra.mxu0 %v941
        %1568 = vmatprep.subr.mxu0 %v954
        %1569 = vmatpush1.msra.mxu0 %v953
        %1570 = vmatprep.subr.mxu0 %v966
        %1571 = vmatpush1.msra.mxu0 %v965
        %1572 = vmatprep.subr.mxu0 %v978
        %1573 = vmatpush1.msra.mxu0 %v977
        %1574 = vmatprep.subr.mxu0 %v990
        %1575 = vmatpush1.msra.mxu0 %v989
        %1576 = vmatprep.subr.mxu0 %v1002
        %1577 = vmatpush1.msra.mxu0 %v1001
        %1578 = vmatprep.subr.mxu0 %v1014
        %1579 = vmatpush1.msra.mxu0 %v1013
        %1580 = vmatprep.mubr.f32.mxu0 %v250
        %1581 = vmatmul.mubr.f32.gmra.mrb[0].mxu0 %v249
        %v1582 = vpop.f32.mrb[0].mxu0
        %v1583 = vadd.f32 %v1512, %v1582
        %v1584 = vpop.f32.mrb[0].mxu0
        %v1585 = vadd.f32 %v1514, %v1584
        %1586 = vdwg.mxu0
        %1587 = vmatprep.subr.mxu0 %v260
        %1588 = vmatpush1.msra.mxu0 %v259
        %1589 = vmatprep.subr.mxu0 %v272
        %1590 = vmatpush1.msra.mxu0 %v271
        %1591 = vmatprep.subr.mxu0 %v284
        %1592 = vmatpush1.msra.mxu0 %v283
        %1593 = vmatprep.subr.mxu0 %v296
        %1594 = vmatpush1.msra.mxu0 %v295
        %1595 = vmatprep.subr.mxu0 %v308
        %1596 = vmatpush1.msra.mxu0 %v307
        %1597 = vmatprep.subr.mxu0 %v320
        %1598 = vmatpush1.msra.mxu0 %v319
        %1599 = vmatprep.subr.mxu0 %v332
        %1600 = vmatpush1.msra.mxu0 %v331
        %1601 = vmatprep.subr.mxu0 %v344
        %1602 = vmatpush1.msra.mxu0 %v343
        %1603 = vmatprep.subr.mxu0 %v356
        %1604 = vmatpush1.msra.mxu0 %v355
        %1605 = vmatprep.subr.mxu0 %v368
        %1606 = vmatpush1.msra.mxu0 %v367
        %1607 = vmatprep.subr.mxu0 %v380
        %1608 = vmatpush1.msra.mxu0 %v379
        %1609 = vmatprep.subr.mxu0 %v392
        %1610 = vmatpush1.msra.mxu0 %v391
        %1611 = vmatprep.subr.mxu0 %v404
        %1612 = vmatpush1.msra.mxu0 %v403
        %1613 = vmatprep.subr.mxu0 %v416
        %1614 = vmatpush1.msra.mxu0 %v415
        %1615 = vmatprep.subr.mxu0 %v428
        %1616 = vmatpush1.msra.mxu0 %v427
        %1617 = vmatprep.subr.mxu0 %v440
        %1618 = vmatpush1.msra.mxu0 %v439
        %1619 = vmatprep.subr.mxu0 %v452
        %1620 = vmatpush1.msra.mxu0 %v451
        %1621 = vmatprep.subr.mxu0 %v464
        %1622 = vmatpush1.msra.mxu0 %v463
        %1623 = vmatprep.subr.mxu0 %v476
        %1624 = vmatpush1.msra.mxu0 %v475
        %1625 = vmatprep.subr.mxu0 %v488
        %1626 = vmatpush1.msra.mxu0 %v487
        %1627 = vmatprep.subr.mxu0 %v500
        %1628 = vmatpush1.msra.mxu0 %v499
        %1629 = vmatprep.subr.mxu0 %v512
        %1630 = vmatpush1.msra.mxu0 %v511
        %1631 = vmatprep.subr.mxu0 %v524
        %1632 = vmatpush1.msra.mxu0 %v523
        %1633 = vmatprep.subr.mxu0 %v536
        %1634 = vmatpush1.msra.mxu0 %v535
        %1635 = vmatprep.subr.mxu0 %v548
        %1636 = vmatpush1.msra.mxu0 %v547
        %1637 = vmatprep.subr.mxu0 %v560
        %1638 = vmatpush1.msra.mxu0 %v559
        %1639 = vmatprep.subr.mxu0 %v572
        %1640 = vmatpush1.msra.mxu0 %v571
        %1641 = vmatprep.subr.mxu0 %v584
        %1642 = vmatpush1.msra.mxu0 %v583
        %1643 = vmatprep.subr.mxu0 %v596
        %1644 = vmatpush1.msra.mxu0 %v595
        %1645 = vmatprep.subr.mxu0 %v608
        %1646 = vmatpush1.msra.mxu0 %v607
        %1647 = vmatprep.subr.mxu0 %v620
        %1648 = vmatpush1.msra.mxu0 %v619
        %1649 = vmatprep.subr.mxu0 %v632
        %1650 = vmatpush1.msra.mxu0 %v631
        %1651 = vmatprep.mubr.f32.mxu0 %v248
        %1652 = vmatmul.mubr.f32.gmra.mrb[0].mxu0 %v247
        %v1653 = vpop.f32.mrb[0].mxu0
        %v1654 = vadd.f32 0.0, %v1653
        %v1655 = vpop.f32.mrb[0].mxu0
        %v1656 = vadd.f32 0.0, %v1655
        %1657 = vdwg.mxu0
        %1658 = vmatprep.subr.mxu0 %v644
        %1659 = vmatpush1.msra.mxu0 %v643
        %1660 = vmatprep.subr.mxu0 %v656
        %1661 = vmatpush1.msra.mxu0 %v655
        %1662 = vmatprep.subr.mxu0 %v668
        %1663 = vmatpush1.msra.mxu0 %v667
        %1664 = vmatprep.subr.mxu0 %v680
        %1665 = vmatpush1.msra.mxu0 %v679
        %1666 = vmatprep.subr.mxu0 %v692
        %1667 = vmatpush1.msra.mxu0 %v691
        %1668 = vmatprep.subr.mxu0 %v704
        %1669 = vmatpush1.msra.mxu0 %v703
        %1670 = vmatprep.subr.mxu0 %v716
        %1671 = vmatpush1.msra.mxu0 %v715
        %1672 = vmatprep.subr.mxu0 %v728
        %1673 = vmatpush1.msra.mxu0 %v727
        %1674 = vmatprep.subr.mxu0 %v740
        %1675 = vmatpush1.msra.mxu0 %v739
        %1676 = vmatprep.subr.mxu0 %v752
        %1677 = vmatpush1.msra.mxu0 %v751
        %1678 = vmatprep.subr.mxu0 %v764
        %1679 = vmatpush1.msra.mxu0 %v763
        %1680 = vmatprep.subr.mxu0 %v776
        %1681 = vmatpush1.msra.mxu0 %v775
        %1682 = vmatprep.subr.mxu0 %v788
        %1683 = vmatpush1.msra.mxu0 %v787
        %1684 = vmatprep.subr.mxu0 %v800
        %1685 = vmatpush1.msra.mxu0 %v799
        %1686 = vmatprep.subr.mxu0 %v812
        %1687 = vmatpush1.msra.mxu0 %v811
        %1688 = vmatprep.subr.mxu0 %v824
        %1689 = vmatpush1.msra.mxu0 %v823
        %1690 = vmatprep.subr.mxu0 %v836
        %1691 = vmatpush1.msra.mxu0 %v835
        %1692 = vmatprep.subr.mxu0 %v848
        %1693 = vmatpush1.msra.mxu0 %v847
        %1694 = vmatprep.subr.mxu0 %v860
        %1695 = vmatpush1.msra.mxu0 %v859
        %1696 = vmatprep.subr.mxu0 %v872
        %1697 = vmatpush1.msra.mxu0 %v871
        %1698 = vmatprep.subr.mxu0 %v884
        %1699 = vmatpush1.msra.mxu0 %v883
        %1700 = vmatprep.subr.mxu0 %v896
        %1701 = vmatpush1.msra.mxu0 %v895
        %1702 = vmatprep.subr.mxu0 %v908
        %1703 = vmatpush1.msra.mxu0 %v907
        %1704 = vmatprep.subr.mxu0 %v920
        %1705 = vmatpush1.msra.mxu0 %v919
        %1706 = vmatprep.subr.mxu0 %v932
        %1707 = vmatpush1.msra.mxu0 %v931
        %1708 = vmatprep.subr.mxu0 %v944
        %1709 = vmatpush1.msra.mxu0 %v943
        %1710 = vmatprep.subr.mxu0 %v956
        %1711 = vmatpush1.msra.mxu0 %v955
        %1712 = vmatprep.subr.mxu0 %v968
        %1713 = vmatpush1.msra.mxu0 %v967
        %1714 = vmatprep.subr.mxu0 %v980
        %1715 = vmatpush1.msra.mxu0 %v979
        %1716 = vmatprep.subr.mxu0 %v992
        %1717 = vmatpush1.msra.mxu0 %v991
        %1718 = vmatprep.subr.mxu0 %v1004
        %1719 = vmatpush1.msra.mxu0 %v1003
        %1720 = vmatprep.subr.mxu0 %v1016
        %1721 = vmatpush1.msra.mxu0 %v1015
        %1722 = vmatprep.mubr.f32.mxu0 %v250
        %1723 = vmatmul.mubr.f32.gmra.mrb[0].mxu0 %v249
        %v1724 = vpop.f32.mrb[0].mxu0
        %v1725 = vadd.f32 %v1654, %v1724
        %v1726 = vpop.f32.mrb[0].mxu0
        %v1727 = vadd.f32 %v1656, %v1726
        %1728 = vdwg.mxu0
        %1729 = vmatprep.subr.mxu0 %v262
        %1730 = vmatpush1.msra.mxu0 %v261
        %1731 = vmatprep.subr.mxu0 %v274
        %1732 = vmatpush1.msra.mxu0 %v273
        %1733 = vmatprep.subr.mxu0 %v286
        %1734 = vmatpush1.msra.mxu0 %v285
        %1735 = vmatprep.subr.mxu0 %v298
        %1736 = vmatpush1.msra.mxu0 %v297
        %1737 = vmatprep.subr.mxu0 %v310
        %1738 = vmatpush1.msra.mxu0 %v309
        %1739 = vmatprep.subr.mxu0 %v322
        %1740 = vmatpush1.msra.mxu0 %v321
        %1741 = vmatprep.subr.mxu0 %v334
        %1742 = vmatpush1.msra.mxu0 %v333
        %1743 = vmatprep.subr.mxu0 %v346
        %1744 = vmatpush1.msra.mxu0 %v345
        %1745 = vmatprep.subr.mxu0 %v358
        %1746 = vmatpush1.msra.mxu0 %v357
        %1747 = vmatprep.subr.mxu0 %v370
        %1748 = vmatpush1.msra.mxu0 %v369
        %1749 = vmatprep.subr.mxu0 %v382
        %1750 = vmatpush1.msra.mxu0 %v381
        %1751 = vmatprep.subr.mxu0 %v394
        %1752 = vmatpush1.msra.mxu0 %v393
        %1753 = vmatprep.subr.mxu0 %v406
        %1754 = vmatpush1.msra.mxu0 %v405
        %1755 = vmatprep.subr.mxu0 %v418
        %1756 = vmatpush1.msra.mxu0 %v417
        %1757 = vmatprep.subr.mxu0 %v430
        %1758 = vmatpush1.msra.mxu0 %v429
        %1759 = vmatprep.subr.mxu0 %v442
        %1760 = vmatpush1.msra.mxu0 %v441
        %1761 = vmatprep.subr.mxu0 %v454
        %1762 = vmatpush1.msra.mxu0 %v453
        %1763 = vmatprep.subr.mxu0 %v466
        %1764 = vmatpush1.msra.mxu0 %v465
        %1765 = vmatprep.subr.mxu0 %v478
        %1766 = vmatpush1.msra.mxu0 %v477
        %1767 = vmatprep.subr.mxu0 %v490
        %1768 = vmatpush1.msra.mxu0 %v489
        %1769 = vmatprep.subr.mxu0 %v502
        %1770 = vmatpush1.msra.mxu0 %v501
        %1771 = vmatprep.subr.mxu0 %v514
        %1772 = vmatpush1.msra.mxu0 %v513
        %1773 = vmatprep.subr.mxu0 %v526
        %1774 = vmatpush1.msra.mxu0 %v525
        %1775 = vmatprep.subr.mxu0 %v538
        %1776 = vmatpush1.msra.mxu0 %v537
        %1777 = vmatprep.subr.mxu0 %v550
        %1778 = vmatpush1.msra.mxu0 %v549
        %1779 = vmatprep.subr.mxu0 %v562
        %1780 = vmatpush1.msra.mxu0 %v561
        %1781 = vmatprep.subr.mxu0 %v574
        %1782 = vmatpush1.msra.mxu0 %v573
        %1783 = vmatprep.subr.mxu0 %v586
        %1784 = vmatpush1.msra.mxu0 %v585
        %1785 = vmatprep.subr.mxu0 %v598
        %1786 = vmatpush1.msra.mxu0 %v597
        %1787 = vmatprep.subr.mxu0 %v610
        %1788 = vmatpush1.msra.mxu0 %v609
        %1789 = vmatprep.subr.mxu0 %v622
        %1790 = vmatpush1.msra.mxu0 %v621
        %1791 = vmatprep.subr.mxu0 %v634
        %1792 = vmatpush1.msra.mxu0 %v633
        %1793 = vmatprep.mubr.f32.mxu0 %v248
        %1794 = vmatmul.mubr.f32.gmra.mrb[0].mxu0 %v247
        %v1795 = vpop.f32.mrb[0].mxu0
        %v1796 = vadd.f32 0.0, %v1795
        %v1797 = vpop.f32.mrb[0].mxu0
        %v1798 = vadd.f32 0.0, %v1797
        %1799 = vdwg.mxu0
        %1800 = vmatprep.subr.mxu0 %v646
        %1801 = vmatpush1.msra.mxu0 %v645
        %1802 = vmatprep.subr.mxu0 %v658
        %1803 = vmatpush1.msra.mxu0 %v657
        %1804 = vmatprep.subr.mxu0 %v670
        %1805 = vmatpush1.msra.mxu0 %v669
        %1806 = vmatprep.subr.mxu0 %v682
        %1807 = vmatpush1.msra.mxu0 %v681
        %1808 = vmatprep.subr.mxu0 %v694
        %1809 = vmatpush1.msra.mxu0 %v693
        %1810 = vmatprep.subr.mxu0 %v706
        %1811 = vmatpush1.msra.mxu0 %v705
        %1812 = vmatprep.subr.mxu0 %v718
        %1813 = vmatpush1.msra.mxu0 %v717
        %1814 = vmatprep.subr.mxu0 %v730
        %1815 = vmatpush1.msra.mxu0 %v729
        %1816 = vmatprep.subr.mxu0 %v742
        %1817 = vmatpush1.msra.mxu0 %v741
        %1818 = vmatprep.subr.mxu0 %v754
        %1819 = vmatpush1.msra.mxu0 %v753
        %1820 = vmatprep.subr.mxu0 %v766
        %1821 = vmatpush1.msra.mxu0 %v765
        %1822 = vmatprep.subr.mxu0 %v778
        %1823 = vmatpush1.msra.mxu0 %v777
        %1824 = vmatprep.subr.mxu0 %v790
        %1825 = vmatpush1.msra.mxu0 %v789
        %1826 = vmatprep.subr.mxu0 %v802
        %1827 = vmatpush1.msra.mxu0 %v801
        %1828 = vmatprep.subr.mxu0 %v814
        %1829 = vmatpush1.msra.mxu0 %v813
        %1830 = vmatprep.subr.mxu0 %v826
        %1831 = vmatpush1.msra.mxu0 %v825
        %1832 = vmatprep.subr.mxu0 %v838
        %1833 = vmatpush1.msra.mxu0 %v837
        %1834 = vmatprep.subr.mxu0 %v850
        %1835 = vmatpush1.msra.mxu0 %v849
        %1836 = vmatprep.subr.mxu0 %v862
        %1837 = vmatpush1.msra.mxu0 %v861
        %1838 = vmatprep.subr.mxu0 %v874
        %1839 = vmatpush1.msra.mxu0 %v873
        %1840 = vmatprep.subr.mxu0 %v886
        %1841 = vmatpush1.msra.mxu0 %v885
        %1842 = vmatprep.subr.mxu0 %v898
        %1843 = vmatpush1.msra.mxu0 %v897
        %1844 = vmatprep.subr.mxu0 %v910
        %1845 = vmatpush1.msra.mxu0 %v909
        %1846 = vmatprep.subr.mxu0 %v922
        %1847 = vmatpush1.msra.mxu0 %v921
        %1848 = vmatprep.subr.mxu0 %v934
        %1849 = vmatpush1.msra.mxu0 %v933
        %1850 = vmatprep.subr.mxu0 %v946
        %1851 = vmatpush1.msra.mxu0 %v945
        %1852 = vmatprep.subr.mxu0 %v958
        %1853 = vmatpush1.msra.mxu0 %v957
        %1854 = vmatprep.subr.mxu0 %v970
        %1855 = vmatpush1.msra.mxu0 %v969
        %1856 = vmatprep.subr.mxu0 %v982
        %1857 = vmatpush1.msra.mxu0 %v981
        %1858 = vmatprep.subr.mxu0 %v994
        %1859 = vmatpush1.msra.mxu0 %v993
        %1860 = vmatprep.subr.mxu0 %v1006
        %1861 = vmatpush1.msra.mxu0 %v1005
        %1862 = vmatprep.subr.mxu0 %v1018
        %1863 = vmatpush1.msra.mxu0 %v1017
        %1864 = vmatprep.mubr.f32.mxu0 %v250
        %1865 = vmatmul.mubr.f32.gmra.mrb[0].mxu0 %v249
        %v1866 = vpop.f32.mrb[0].mxu0
        %v1867 = vadd.f32 %v1796, %v1866
        %v1868 = vpop.f32.mrb[0].mxu0
        %v1869 = vadd.f32 %v1798, %v1868
        %1870 = vdwg.mxu0
        %1871 = vst [vmem:[%s232] sm:$0xff] %v1157
        %1872 = vst [vmem:[%s232 + $0x8] sm:$0xff] %v1159
        %1873 = vst [vmem:[%s232 + $0x10] sm:$0xff] %v1299
        %1874 = vst [vmem:[%s232 + $0x18] sm:$0xff] %v1301
        %1875 = vst [vmem:[%s239] sm:$0xff] %v1441
        %1876 = vst [vmem:[%s239 + $0x8] sm:$0xff] %v1443
        %1877 = vst [vmem:[%s239 + $0x10] sm:$0xff] %v1583
        %1878 = vst [vmem:[%s239 + $0x18] sm:$0xff] %v1585
        %1879 = vst [vmem:[%s246] sm:$0xff] %v1725
        %1880 = vst [vmem:[%s246 + $0x8] sm:$0xff] %v1727
        %1881 = vst [vmem:[%s246 + $0x10] sm:$0xff] %v1867
        %1882 = vst [vmem:[%s246 + $0x18] sm:$0xff] %v1869
        %s1883 = sand.u32 %s81, 1
        %s1884 = scalar_lea.sflag [#allocation4], %s1883
        %s1885 = sand.u32 %s81, 1
        %s1886 = smul.addr %s1885, 32
        %s1887 = scalar_lea.vmem [#allocation7], %s1886
        %s1888 = sand.u32 %s26, 1
        %s1889 = scalar_lea.sflag [#allocation9], %s1888
        %s1890 = sand.u32 %s107, 1
        %s1891 = smul.addr %s1890, 32
        %s1892 = scalar_lea.vmem [#allocation8], %s1891
        %s1893 = sand.u32 %s26, 1
        %s1894 = scalar_lea.sflag [#allocation9], %s1893
        %s1895 = sand.u32 %s133, 1
        %s1896 = smul.addr %s1895, 32
        %s1897 = scalar_lea.vmem [#allocation10], %s1896
        // Predicated region
        $region37: #{tpu_custom_call.1} parent=27 // pred_check
          %p1898 = pneg %p91
        $region38: #{tpu_custom_call.1} parent=27 // pred_check_branch
          %1900 = sbr.rel (%p1898) target = $region40
        $region39: #{tpu_custom_call.1} parent=27 // pred_region
          %s1902 = ssub.s32 512, 512
          %1903 = vsyncadd %s1884, %s1902
          %s1904 = smul.addr %s26, 4
          %s1905 = smul.addr %s1904, 128
          %s1906 = scalar_lea.hbm %s2, %s1905
          %s1908 = sshll.u32 %s1887, 4
          %s1909 = int_to_ptr.vmem [resolvable:$true] %s1908
          %1911 = dma.vmem_to_hbm [thread:$0]  %s1909, 512, %s1906, %s1884
        $region40: #{tpu_custom_call.1} parent=27 // pred_fallthru
          _
        // Predicated region
        $region41: #{tpu_custom_call.1} parent=27 // pred_check
          %p1912 = pneg %p117
        $region42: #{tpu_custom_call.1} parent=27 // pred_check_branch
          %1914 = sbr.rel (%p1912) target = $region44
        $region43: #{tpu_custom_call.1} parent=27 // pred_region
          %s1916 = ssub.s32 512, 512
          %1917 = vsyncadd %s1889, %s1916
          %s1918 = smul.addr %s26, 4
          %s1919 = smul.addr %s1918, 128
          %s1920 = scalar_lea.hbm %s3, %s1919
          %s1922 = sshll.u32 %s1892, 4
          %s1923 = int_to_ptr.vmem [resolvable:$true] %s1922
          %1925 = dma.vmem_to_hbm [thread:$0]  %s1923, 512, %s1920, %s1889
        $region44: #{tpu_custom_call.1} parent=27 // pred_fallthru
          _
        // Predicated region
        $region45: #{tpu_custom_call.1} parent=27 // pred_check
          %p1926 = pneg %p143
        $region46: #{tpu_custom_call.1} parent=27 // pred_check_branch
          %1928 = sbr.rel (%p1926) target = $region48
        $region47: #{tpu_custom_call.1} parent=27 // pred_region
          %s1930 = ssub.s32 512, 512
          %1931 = vsyncadd %s1894, %s1930
          %s1932 = smul.addr %s26, 4
          %s1933 = smul.addr %s1932, 128
          %s1934 = scalar_lea.hbm %s4, %s1933
          %s1936 = sshll.u32 %s1897, 4
          %s1937 = int_to_ptr.vmem [resolvable:$true] %s1936
          %1939 = dma.vmem_to_hbm [thread:$0]  %s1937, 512, %s1934, %s1894
        $region48: #{tpu_custom_call.1} parent=27 // pred_fallthru
          _
      $region28: #{tpu_custom_call.1} parent=5 // pred_fallthru
        _
      %p1940 = scmp.le.s32.totalorder 2, %s21
      // Predicated region
      $region49: #{tpu_custom_call.1} parent=5 // pred_check
        %p1941 = pneg %p1940
      $region50: #{tpu_custom_call.1} parent=5 // pred_check_branch
        %1943 = sbr.rel (%p1941) target = $region52
      $region51: #{tpu_custom_call.1} parent=5 // pred_region
        %s1944 = ssub.s32 %s21, 2
        // Predicated region
        $region53: #{tpu_custom_call.1} parent=51 // pred_check
          %p1945 = pneg %p97
        $region54: #{tpu_custom_call.1} parent=51 // pred_check_branch
          %1947 = sbr.rel (%p1945) target = $region56
        $region55: #{tpu_custom_call.1} parent=51 // pred_region
          %s1948 = sand.u32 %s82, 1
          %s1949 = scalar_lea.sflag [#allocation4], %s1948
          %s1950 = sand.u32 %s82, 1
          %s1951 = smul.addr %s1950, 32
          %s1952 = scalar_lea.vmem [#allocation7], %s1951
          %1953 = dma.done %s1949, 512
        $region56: #{tpu_custom_call.1} parent=51 // pred_fallthru
          _
        // Predicated region
        $region57: #{tpu_custom_call.1} parent=51 // pred_check
          %p1954 = pneg %p123
        $region58: #{tpu_custom_call.1} parent=51 // pred_check_branch
          %1956 = sbr.rel (%p1954) target = $region60
        $region59: #{tpu_custom_call.1} parent=51 // pred_region
          %s1957 = sand.u32 %s27, 1
          %s1958 = scalar_lea.sflag [#allocation9], %s1957
          %s1959 = sand.u32 %s108, 1
          %s1960 = smul.addr %s1959, 32
          %s1961 = scalar_lea.vmem [#allocation8], %s1960
          %1962 = dma.done %s1958, 512
        $region60: #{tpu_custom_call.1} parent=51 // pred_fallthru
          _
        // Predicated region
        $region61: #{tpu_custom_call.1} parent=51 // pred_check
          %p1963 = pneg %p149
        $region62: #{tpu_custom_call.1} parent=51 // pred_check_branch
          %1965 = sbr.rel (%p1963) target = $region64
        $region63: #{tpu_custom_call.1} parent=51 // pred_region
          %s1966 = sand.u32 %s27, 1
          %s1967 = scalar_lea.sflag [#allocation9], %s1966
          %s1968 = sand.u32 %s134, 1
          %s1969 = smul.addr %s1968, 32
          %s1970 = scalar_lea.vmem [#allocation10], %s1969
          %1971 = dma.done %s1967, 512
        $region64: #{tpu_custom_call.1} parent=51 // pred_fallthru
          _
      $region52: #{tpu_custom_call.1} parent=5 // pred_fallthru
        _
    $region6: #{tpu_custom_call.1} parent=1 // loop_footer
      %s25 = sadd.s32 1, %s21
    $region7: #{tpu_custom_call.1} parent=1 // loop_footer_branch
      %20 = sbr.rel target = $region3
    $region8: #{tpu_custom_call.1} parent=1 // loop_exit
      _
    %1972 = vsyncpa [#allocation3], 1
    %s1973 = scalar_lea.sflag [#allocation3], 1
    %1974 = vsyncpa %s1973, 1
    %1975 = vsyncpa [#allocation6], 1
    %1976 = vsyncpa [#allocation4], 1
    %s1977 = scalar_lea.sflag [#allocation4], 1
    %1978 = vsyncpa %s1977, 1
    %1979 = vsyncpa [#allocation9], 1
    %s1980 = scalar_lea.sflag [#allocation9], 1
    %1981 = vsyncpa %s1980, 1

</llo_original>
